<compile_context>
chip_gen: v5e
topology: v5e:2x2
jax: 0.10.0
libtpu: 0.0.40
codegen_flags: <defaults>
</compile_context>

<pallas_src>
import functools
import math

import jax
import jax.numpy as jnp
from jax.experimental import pallas as pl
from jax.experimental.pallas import tpu as pltpu


# ------------------------------ activations --------------------------------


def _apply_activation(x, activation):
    """JAX equivalents of get_activation_fn (PyTorch defaults)."""
    a = activation.lower()
    if a == "leakyrelu":
        return jnp.where(x >= 0, x, 0.01 * x)
    if a == "relu":
        return jnp.maximum(x, 0.0)
    if a == "prelu":
        # TODO(synk): PReLU slope is learnable in PyTorch; fixed at init value 0.25 here.
        return jnp.where(x >= 0, x, 0.25 * x)
    if a == "selu":
        alpha = 1.6732632423543772
        scale = 1.0507009873554805
        return scale * jnp.where(x > 0, x, alpha * jnp.expm1(x))
    if a == "gelu":
        return 0.5 * x * (1.0 + jax.lax.erf(x * jnp.float32(1.0 / math.sqrt(2.0))))
    if a in ("elu", "celu"):  # celu with alpha=1.0 == elu
        return jnp.where(x > 0, x, jnp.expm1(x))
    if a == "sigmoid":
        return jax.nn.sigmoid(x)
    if a == "logsigmoid":
        return jax.nn.log_sigmoid(x)
    if a == "atan":
        return jnp.arctan(x)
    if a == "silu":
        return x * jax.nn.sigmoid(x)
    if a == "soft":  # Softsign
        return x / (1.0 + jnp.abs(x))
    if a == "tanh":
        return jnp.tanh(x)
    if a == "identity":
        return x
    raise ValueError("Activation function {} not implemented!".format(activation))


# ------------------------------ Pallas kernel -------------------------------


def _messagenet_kernel(*refs, depth, activation, has_bias):
    # refs = (x_ref, w0[, b0], w1[, b1], ..., o_ref)
    x_ref = refs[0]
    o_ref = refs[-1]
    param_refs = refs[1:-1]

    h = x_ref[...]
    if not jnp.issubdtype(h.dtype, jnp.floating):
        h = h.astype(jnp.float32)

    idx = 0
    for _ in range(depth):
        w = param_refs[idx][...]
        idx += 1
        w_dtype = w.dtype
        if h.dtype != w_dtype:
            # Mixed operand dtypes: promote both to f32 for the MXU.
            h = h.astype(jnp.float32)
            w = w.astype(jnp.float32)
        # Native-precision operands (bf16 stays bf16) with f32 accumulation.
        acc = jnp.dot(h, w, preferred_element_type=jnp.float32)
        if has_bias:
            acc = acc + param_refs[idx][...].astype(jnp.float32)
            idx += 1
        acc = _apply_activation(acc, activation)
        # Feed the next layer at the parameter dtype so bf16 models keep
        # native bf16 x bf16 -> f32 matmuls (no-op for f32 models).
        h = acc if w_dtype == jnp.float32 else acc.astype(w_dtype)

    o_ref[...] = h.astype(o_ref.dtype)


# ------------------------------ helpers -------------------------------------


def _round_up(x, m):
    return ((x + m - 1) // m) * m


def _block_diag(w, p):
    """Block-diagonal replication of a (C_in, C_out) weight, p blocks."""
    c_in, c_out = w.shape
    out = jnp.zeros((p * c_in, p * c_out), w.dtype)
    for k in range(p):
        out = out.at[k * c_in:(k + 1) * c_in, k * c_out:(k + 1) * c_out].set(w)
    return out


# ------------------------------ module wrapper ------------------------------


class MessageNetPallas:
    """Pallas port of MessageNet (batchnorm disabled, inference forward)."""

    def __init__(
        self,
        num_channels,
        depth=1,
        activation="leakyrelu",
        ir_safe=False,
        batchnorm=None,
        masked=True,
        tile_rows=8192,
        lane_pack=True,
        single_buffer_params=True,
        key=jax.random.PRNGKey(42),
        dtype=jnp.float32,
    ):
        if not isinstance(num_channels, (list, tuple)):
            num_channels = [num_channels] * (depth + 1)
        self.num_channels = list(num_channels)
        self.depth = len(num_channels) - 1
        self.activation = activation
        self.has_bias = not ir_safe
        self.masked = masked
        self.tile_rows = int(tile_rows)
        self.lane_pack = lane_pack
        self.single_buffer_params = single_buffer_params
        self.dtype = dtype

        if batchnorm:
            # TODO(synk): Masked/plain batch-/instance-norm branches of
            # MessageNet.forward not implemented (norm layers not in spec).
            raise NotImplementedError("batchnorm branches not supported")
        self.batchnorm = batchnorm

        # nn.Linear-style init: U(-1/sqrt(fan_in), 1/sqrt(fan_in)).
        # Weights stored as (C_in, C_out) (transposed vs. torch).
        self.weights = []
        self.biases = []
        keys = jax.random.split(key, 2 * self.depth)
        for i in range(self.depth):
            c_in, c_out = self.num_channels[i], self.num_channels[i + 1]
            bound = 1.0 / math.sqrt(c_in)
            w = jax.random.uniform(keys[2 * i], (c_in, c_out), jnp.float32, -bound, bound)
            self.weights.append(w.astype(dtype))
            if self.has_bias:
                b = jax.random.uniform(
                    keys[2 * i + 1], (1, c_out), jnp.float32, -bound, bound
                )
                self.biases.append(b.astype(dtype))

    def scale_weights(self, scale):
        self.weights[-1] = self.weights[-1] * scale
        if self.has_bias:
            self.biases[-1] = self.biases[-1] * scale

    # --- lane-dense row-packing factor (power of two, divides n, capped) ----
    def _pick_pack(self, n):
        if not self.lane_pack or n <= 0:
            return 1
        cmin = min(self.num_channels)
        cmax = max(self.num_channels)
        p = 1
        while (
            p < 8
            and cmin * p < 128
            and n % (2 * p) == 0
            and cmax * 2 * p <= 2048
        ):
            p *= 2
        return p

    def __call__(self, x, mask=None):
        # `mask` only feeds the batchnorm branches, which are disabled here.
        lead = x.shape[:-1]
        c_in = x.shape[-1]
        c_out = self.num_channels[-1]
        assert c_in == self.num_channels[0], "last-axis size must match num_channels[0]"

        n = int(math.prod(lead)) if lead else 1
        x2 = x.reshape(n, c_in)
        out_dtype = x.dtype if jnp.issubdtype(x.dtype, jnp.floating) else self.dtype

        # Lane-dense packing: group P consecutive rows (free contiguous
        # reshape) + block-diagonal weights so every block has >=128 lanes.
        p = self._pick_pack(n)
        if p > 1:
            x2 = x2.reshape(n // p, p * c_in)
            weights = [_block_diag(w, p) for w in self.weights]
            biases = [jnp.tile(b, (1, p)) for b in self.biases]
        else:
            weights = list(self.weights)
            biases = list(self.biases)

        n_rows = x2.shape[0]
        pc_in = p * c_in
        pc_out = p * c_out

        # Row tile: big (amortize per-grid-step overhead), but <= ~n/2 so the
        # "parallel" axis gives both v7x TensorCores work, and VMEM-bounded.
        itemsize_in = jnp.dtype(x2.dtype).itemsize
        itemsize_out = jnp.dtype(out_dtype).itemsize
        mult = 16 if min(itemsize_in, itemsize_out) < 4 else 8
        tile_n = min(self.tile_rows, max(mult, _round_up(pl.cdiv(n_rows, 2), mult)))

        max_chan = p * max(self.num_channels)
        param_bytes = sum(int(w.size) * w.dtype.itemsize for w in weights) + sum(
            int(b.size) * b.dtype.itemsize for b in biases
        )

        def vmem_est(t):
            io_blocks = 2 * t * (pc_in * itemsize_in + pc_out * itemsize_out)
            interm = 2 * t * max_chan * 4  # in-kernel f32 temporaries (rough)
            return io_blocks + interm + 2 * param_bytes

        while tile_n > mult and vmem_est(tile_n) > 40 * 1024 * 1024:
            tile_n = max(mult, _round_up(tile_n // 2, mult))

        grid = (pl.cdiv(n_rows, tile_n),)  # ragged last block handled by Pallas
        vmem_limit = int(
            min(48 * 1024 * 1024, max(32 * 1024 * 1024, int(vmem_est(tile_n) * 1.5)))
        )

        # Interleave params (w0, b0, w1, b1, ...).
        params = []
        for i in range(self.depth):
            params.append(weights[i])
            if self.has_bias:
                params.append(biases[i])

        kernel = functools.partial(
            _messagenet_kernel,
            depth=self.depth,
            activation=self.activation,
            has_bias=self.has_bias,
        )

        def run(single_buffer_params):
            param_specs = []
            for prm in params:
                if single_buffer_params:
                    spec = pl.BlockSpec(
                        prm.shape, lambda i: (0, 0), pipeline_mode=pl.Buffered(1)
                    )
                else:
                    spec = pl.BlockSpec(prm.shape, lambda i: (0, 0))
                param_specs.append(spec)
            in_specs = [pl.BlockSpec((tile_n, pc_in), lambda i: (i, 0))] + param_specs
            out_spec = pl.BlockSpec((tile_n, pc_out), lambda i: (i, 0))
            return pl.pallas_call(
                kernel,
                out_shape=jax.ShapeDtypeStruct((n_rows, pc_out), out_dtype),
                grid=grid,
                in_specs=in_specs,
                out_specs=out_spec,
                compiler_params=pltpu.CompilerParams(
                    dimension_semantics=("parallel",),
                    vmem_limit_bytes=vmem_limit,
                ),
            )(x2, *params)

        if self.single_buffer_params:
            try:
                out = run(True)
            except Exception:
                # TODO(synk): fall back if pl.Buffered(1) params are rejected by this JAX/Mosaic build.
                out = run(False)
        else:
            out = run(False)

        if p > 1:
            out = out.reshape(n, c_out)  # contiguous, free
        return out.reshape(lead + (c_out,))


# --------------------------------- reference ---------------------------------


def _reference(net, x):
    """Pure-JAX reference, emulating the kernel's dtype handling."""
    low_prec = jnp.dtype(net.dtype) == jnp.dtype(jnp.bfloat16)
    h = x.reshape(-1, x.shape[-1]).astype(jnp.float32)
    for i in range(net.depth):
        h = h @ net.weights[i].astype(jnp.float32)
        if net.has_bias:
            h = h + net.biases[i].astype(jnp.float32)
        h = _apply_activation(h, net.activation)
        if low_prec and i + 1 < net.depth:
            h = h.astype(jnp.bfloat16).astype(jnp.float32)
    return h.reshape(x.shape[:-1] + (net.num_channels[-1],))


if __name__ == "__main__":
    key = jax.random.PRNGKey(0)
    kx1, kx2, kx3 = jax.random.split(key, 3)

    B, S, C = 2, 16, 32  # x: (batch, seq, seq, channels) -> operates on last axis

    # Config 1: two layers [32 -> 64 -> 32], leakyrelu, with bias. Rows pack
    # 4x to 128 lanes; a 2-step row grid exercises tiling/pipelining.
    net1 = MessageNetPallas(
        num_channels=[C, 64, C],
        activation="leakyrelu",
        ir_safe=False,
        key=jax.random.PRNGKey(42),
    )
    x1 = jax.random.normal(kx1, (B, S, S, C), jnp.float32)
    out1 = net1(x1)  # mask unused (batchnorm=None), matching the torch forward
    jax.block_until_ready(out1)
    ref1 = _reference(net1, x1)
    assert out1.shape == (B, S, S, C)
    assert jnp.allclose(out1, ref1, atol=1e-5, rtol=1e-5)

    # Config 2: scalar num_channels + depth (linear stack 32->32), ir_safe
    # (no bias), relu activation.
    net2 = MessageNetPallas(
        num_channels=C,
        depth=1,
        activation="relu",
        ir_safe=True,
        key=jax.random.PRNGKey(7),
    )
    x2 = jax.random.normal(kx2, (B, S, C), jnp.float32)
    out2 = net2(x2)
    jax.block_until_ready(out2)
    ref2 = _reference(net2, x2)
    assert out2.shape == (B, S, C)
    assert jnp.allclose(out2, ref2, atol=1e-5, rtol=1e-5)

    # Config 3: bf16 I/O + bf16 params (f32 accumulation in-kernel) with a
    # row count that is NOT a tile multiple -> exercises the ragged cdiv grid.
    net3 = MessageNetPallas(
        num_channels=[C, 64, C],
        activation="silu",
        ir_safe=False,
        key=jax.random.PRNGKey(3),
        dtype=jnp.bfloat16,
    )
    x3 = jax.random.normal(kx3, (2, 15, C), jnp.float32).astype(jnp.bfloat16)
    out3 = net3(x3)
    jax.block_until_ready(out3)
    ref3 = _reference(net3, x3)
    assert out3.shape == (2, 15, C)
    assert jnp.allclose(out3.astype(jnp.float32), ref3, atol=3e-2, rtol=3e-2)

    print("KERNEL_OK")
</pallas_src>

<mosaic_0001>
module attributes {stable_mosaic.version = 11 : i64} {
  func.func @_messagenet_kernel(%arg0: i32, %arg1: memref<64x128xf32, #tpu.memory_space<vmem>>, %arg2: memref<128x256xf32, #tpu.memory_space<vmem>>, %arg3: memref<1x256xf32, #tpu.memory_space<vmem>>, %arg4: memref<256x128xf32, #tpu.memory_space<vmem>>, %arg5: memref<1x128xf32, #tpu.memory_space<vmem>>, %arg6: memref<64x128xf32, #tpu.memory_space<vmem>>) attributes {dimension_semantics = [#tpu.dimension_semantics<parallel>], iteration_bounds = array<i64: 2>, scalar_prefetch = 0 : i64, scratch_operands = 0 : i64, tpu.core_type = #tpu.core_type<tc>, window_params = [{transform_indices = @transform_0, window_bounds = array<i64: 64, 128>}, {pipeline_mode = #tpu.pipeline_mode<synchronous>, transform_indices = @transform_1, window_bounds = array<i64: 128, 256>}, {pipeline_mode = #tpu.pipeline_mode<synchronous>, transform_indices = @transform_2, window_bounds = array<i64: 1, 256>}, {pipeline_mode = #tpu.pipeline_mode<synchronous>, transform_indices = @transform_3, window_bounds = array<i64: 256, 128>}, {pipeline_mode = #tpu.pipeline_mode<synchronous>, transform_indices = @transform_4, window_bounds = array<i64: 1, 128>}, {transform_indices = @transform_5, window_bounds = array<i64: 64, 128>}]} {
    %c0 = arith.constant 0 : index
    %c0_0 = arith.constant 0 : index
    %0 = vector.load %arg1[%c0, %c0_0] : memref<64x128xf32, #tpu.memory_space<vmem>>, vector<64x128xf32>
    %c0_1 = arith.constant 0 : index
    %c0_2 = arith.constant 0 : index
    %1 = vector.load %arg2[%c0_1, %c0_2] : memref<128x256xf32, #tpu.memory_space<vmem>>, vector<128x256xf32>
    %cst = arith.constant dense<0.000000e+00> : vector<64x256xf32>
    %2 = tpu.matmul %0, %1, %cst {dimension_numbers = #tpu.dot_dimension_numbers<[1], [0], [0], [1], [0, 0, 1, 1], [], []>} : vector<64x128xf32>, vector<128x256xf32>, vector<64x256xf32> -> vector<64x256xf32>
    %c0_3 = arith.constant 0 : index
    %c0_4 = arith.constant 0 : index
    %3 = vector.load %arg3[%c0_3, %c0_4] : memref<1x256xf32, #tpu.memory_space<vmem>>, vector<1x256xf32>
    %4 = vector.broadcast %3 : vector<1x256xf32> to vector<64x256xf32>
    %5 = arith.addf %2, %4 : vector<64x256xf32>
    %cst_5 = arith.constant 0.000000e+00 : f32
    %6 = vector.broadcast %cst_5 : f32 to vector<64x256xf32>
    %7 = arith.cmpf oge, %5, %6 : vector<64x256xf32>
    %cst_6 = arith.constant 0.00999999977 : f32
    %8 = vector.broadcast %cst_6 : f32 to vector<64x256xf32>
    %9 = arith.mulf %8, %5 : vector<64x256xf32>
    %10 = arith.select %7, %5, %9 : vector<64x256xi1>, vector<64x256xf32>
    %c0_7 = arith.constant 0 : index
    %c0_8 = arith.constant 0 : index
    %11 = vector.load %arg4[%c0_7, %c0_8] : memref<256x128xf32, #tpu.memory_space<vmem>>, vector<256x128xf32>
    %cst_9 = arith.constant dense<0.000000e+00> : vector<64x128xf32>
    %12 = tpu.matmul %10, %11, %cst_9 {dimension_numbers = #tpu.dot_dimension_numbers<[1], [0], [0], [1], [0, 0, 1, 1], [], []>} : vector<64x256xf32>, vector<256x128xf32>, vector<64x128xf32> -> vector<64x128xf32>
    %c0_10 = arith.constant 0 : index
    %c0_11 = arith.constant 0 : index
    %13 = vector.load %arg5[%c0_10, %c0_11] : memref<1x128xf32, #tpu.memory_space<vmem>>, vector<1x128xf32>
    %14 = vector.broadcast %13 : vector<1x128xf32> to vector<64x128xf32>
    %15 = arith.addf %12, %14 : vector<64x128xf32>
    %cst_12 = arith.constant 0.000000e+00 : f32
    %16 = vector.broadcast %cst_12 : f32 to vector<64x128xf32>
    %17 = arith.cmpf oge, %15, %16 : vector<64x128xf32>
    %cst_13 = arith.constant 0.00999999977 : f32
    %18 = vector.broadcast %cst_13 : f32 to vector<64x128xf32>
    %19 = arith.mulf %18, %15 : vector<64x128xf32>
    %20 = arith.select %17, %15, %19 : vector<64x128xi1>, vector<64x128xf32>
    %c0_14 = arith.constant 0 : index
    %c0_15 = arith.constant 0 : index
    %21 = vector.load %arg6[%c0_14, %c0_15] : memref<64x128xf32, #tpu.memory_space<vmem>>, vector<64x128xf32>
    tpu.vector_store %arg6[%c0_14, %c0_15], %20 {strides = array<i32>} : memref<64x128xf32, #tpu.memory_space<vmem>>, vector<64x128xf32>,
    return
  }
  func.func @transform_0(%arg0: i32) -> (i32, i32) {
    %c0_i32 = arith.constant 0 : i32
    %c0_i32_0 = arith.constant 0 : i32
    return %arg0, %c0_i32 : i32, i32
  }
  func.func @transform_1(%arg0: i32) -> (i32, i32) {
    %c0_i32 = arith.constant 0 : i32
    %c0_i32_0 = arith.constant 0 : i32
    %c0_i32_1 = arith.constant 0 : i32
    return %c0_i32, %c0_i32_0 : i32, i32
  }
  func.func @transform_2(%arg0: i32) -> (i32, i32) {
    %c0_i32 = arith.constant 0 : i32
    %c0_i32_0 = arith.constant 0 : i32
    %c0_i32_1 = arith.constant 0 : i32
    return %c0_i32, %c0_i32_0 : i32, i32
  }
  func.func @transform_3(%arg0: i32) -> (i32, i32) {
    %c0_i32 = arith.constant 0 : i32
    %c0_i32_0 = arith.constant 0 : i32
    %c0_i32_1 = arith.constant 0 : i32
    return %c0_i32, %c0_i32_0 : i32, i32
  }
  func.func @transform_4(%arg0: i32) -> (i32, i32) {
    %c0_i32 = arith.constant 0 : i32
    %c0_i32_0 = arith.constant 0 : i32
    %c0_i32_1 = arith.constant 0 : i32
    return %c0_i32, %c0_i32_0 : i32, i32
  }
  func.func @transform_5(%arg0: i32) -> (i32, i32) {
    %c0_i32 = arith.constant 0 : i32
    %c0_i32_0 = arith.constant 0 : i32
    return %arg0, %c0_i32 : i32, i32
  }
}

module attributes {stable_mosaic.version = 11 : i64} {
  func.func @_messagenet_kernel(%arg0: i32, %arg1: memref<64x128xf32, #tpu.memory_space<vmem>>, %arg2: memref<128x256xf32, #tpu.memory_space<vmem>>, %arg3: memref<1x256xf32, #tpu.memory_space<vmem>>, %arg4: memref<256x128xf32, #tpu.memory_space<vmem>>, %arg5: memref<1x128xf32, #tpu.memory_space<vmem>>, %arg6: memref<64x128xf32, #tpu.memory_space<vmem>>) attributes {dimension_semantics = [#tpu.dimension_semantics<parallel>], iteration_bounds = array<i64: 2>, scalar_prefetch = 0 : i64, scratch_operands = 0 : i64, tpu.core_type = #tpu.core_type<tc>, window_params = [{transform_indices = @transform_0, window_bounds = array<i64: 64, 128>}, {pipeline_mode = #tpu.pipeline_mode<synchronous>, transform_indices = @transform_1, window_bounds = array<i64: 128, 256>}, {pipeline_mode = #tpu.pipeline_mode<synchronous>, transform_indices = @transform_2, window_bounds = array<i64: 1, 256>}, {pipeline_mode = #tpu.pipeline_mode<synchronous>, transform_indices = @transform_3, window_bounds = array<i64: 256, 128>}, {pipeline_mode = #tpu.pipeline_mode<synchronous>, transform_indices = @transform_4, window_bounds = array<i64: 1, 128>}, {transform_indices = @transform_5, window_bounds = array<i64: 64, 128>}]} {
    %c0 = arith.constant 0 : index
    %c0_0 = arith.constant 0 : index
    %0 = vector.load %arg1[%c0, %c0_0] : memref<64x128xf32, #tpu.memory_space<vmem>>, vector<64x128xf32>
    %c0_1 = arith.constant 0 : index
    %c0_2 = arith.constant 0 : index
    %1 = vector.load %arg2[%c0_1, %c0_2] : memref<128x256xf32, #tpu.memory_space<vmem>>, vector<128x256xf32>
    %cst = arith.constant dense<0.000000e+00> : vector<64x256xf32>
    %2 = tpu.matmul %0, %1, %cst {dimension_numbers = #tpu.dot_dimension_numbers<[1], [0], [0], [1], [0, 0, 1, 1], [], []>} : vector<64x128xf32>, vector<128x256xf32>, vector<64x256xf32> -> vector<64x256xf32>
    %c0_3 = arith.constant 0 : index
    %c0_4 = arith.constant 0 : index
    %3 = vector.load %arg3[%c0_3, %c0_4] : memref<1x256xf32, #tpu.memory_space<vmem>>, vector<1x256xf32>
    %4 = vector.broadcast %3 : vector<1x256xf32> to vector<64x256xf32>
    %5 = arith.addf %2, %4 : vector<64x256xf32>
    %cst_5 = arith.constant 0.000000e+00 : f32
    %6 = vector.broadcast %cst_5 : f32 to vector<64x256xf32>
    %7 = arith.cmpf oge, %5, %6 : vector<64x256xf32>
    %cst_6 = arith.constant 0.00999999977 : f32
    %8 = vector.broadcast %cst_6 : f32 to vector<64x256xf32>
    %9 = arith.mulf %8, %5 : vector<64x256xf32>
    %10 = arith.select %7, %5, %9 : vector<64x256xi1>, vector<64x256xf32>
    %c0_7 = arith.constant 0 : index
    %c0_8 = arith.constant 0 : index
    %11 = vector.load %arg4[%c0_7, %c0_8] : memref<256x128xf32, #tpu.memory_space<vmem>>, vector<256x128xf32>
    %cst_9 = arith.constant dense<0.000000e+00> : vector<64x128xf32>
    %12 = tpu.matmul %10, %11, %cst_9 {dimension_numbers = #tpu.dot_dimension_numbers<[1], [0], [0], [1], [0, 0, 1, 1], [], []>} : vector<64x256xf32>, vector<256x128xf32>, vector<64x128xf32> -> vector<64x128xf32>
    %c0_10 = arith.constant 0 : index
    %c0_11 = arith.constant 0 : index
    %13 = vector.load %arg5[%c0_10, %c0_11] : memref<1x128xf32, #tpu.memory_space<vmem>>, vector<1x128xf32>
    %14 = vector.broadcast %13 : vector<1x128xf32> to vector<64x128xf32>
    %15 = arith.addf %12, %14 : vector<64x128xf32>
    %cst_12 = arith.constant 0.000000e+00 : f32
    %16 = vector.broadcast %cst_12 : f32 to vector<64x128xf32>
    %17 = arith.cmpf oge, %15, %16 : vector<64x128xf32>
    %cst_13 = arith.constant 0.00999999977 : f32
    %18 = vector.broadcast %cst_13 : f32 to vector<64x128xf32>
    %19 = arith.mulf %18, %15 : vector<64x128xf32>
    %20 = arith.select %17, %15, %19 : vector<64x128xi1>, vector<64x128xf32>
    %c0_14 = arith.constant 0 : index
    %c0_15 = arith.constant 0 : index
    %21 = vector.load %arg6[%c0_14, %c0_15] : memref<64x128xf32, #tpu.memory_space<vmem>>, vector<64x128xf32>
    tpu.vector_store %arg6[%c0_14, %c0_15], %20 {strides = array<i32>} : memref<64x128xf32, #tpu.memory_space<vmem>>, vector<64x128xf32>,
    return
  }
  func.func @transform_0(%arg0: i32) -> (i32, i32) {
    %c0_i32 = arith.constant 0 : i32
    %c0_i32_0 = arith.constant 0 : i32
    return %arg0, %c0_i32 : i32, i32
  }
  func.func @transform_1(%arg0: i32) -> (i32, i32) {
    %c0_i32 = arith.constant 0 : i32
    %c0_i32_0 = arith.constant 0 : i32
    %c0_i32_1 = arith.constant 0 : i32
    return %c0_i32, %c0_i32_0 : i32, i32
  }
  func.func @transform_2(%arg0: i32) -> (i32, i32) {
    %c0_i32 = arith.constant 0 : i32
    %c0_i32_0 = arith.constant 0 : i32
    %c0_i32_1 = arith.constant 0 : i32
    return %c0_i32, %c0_i32_0 : i32, i32
  }
  func.func @transform_3(%arg0: i32) -> (i32, i32) {
    %c0_i32 = arith.constant 0 : i32
    %c0_i32_0 = arith.constant 0 : i32
    %c0_i32_1 = arith.constant 0 : i32
    return %c0_i32, %c0_i32_0 : i32, i32
  }
  func.func @transform_4(%arg0: i32) -> (i32, i32) {
    %c0_i32 = arith.constant 0 : i32
    %c0_i32_0 = arith.constant 0 : i32
    %c0_i32_1 = arith.constant 0 : i32
    return %c0_i32, %c0_i32_0 : i32, i32
  }
  func.func @transform_5(%arg0: i32) -> (i32, i32) {
    %c0_i32 = arith.constant 0 : i32
    %c0_i32_0 = arith.constant 0 : i32
    return %arg0, %c0_i32 : i32, i32
  }
}

</mosaic_0001>

<llo_original>
// kernel: tpu_custom_call.1
$region0: #{tpu_custom_call.1}
  #allocation0 [shape = 'u32[]', space=smem, size = 0x4, offset = 0x4, fixed_abs, tag = 'smem constant byte address 0x4 - core index']
  #allocation1 [shape = 'u32[72,128]{1,0:T(1,128)}', space=vmem, size = 0x9000, scoped, tag = 'internal scratch']
  %s0 = inlined_call_operand.hbm [shape: f32[128,128], index: 0, kind: input, shape index: {}]
  %s1 = inlined_call_operand.hbm [shape: f32[128,256], index: 1, kind: input, shape index: {}]
  %s2 = inlined_call_operand.hbm [shape: f32[1,256], index: 2, kind: input, shape index: {}]
  %s3 = inlined_call_operand.hbm [shape: f32[256,128], index: 3, kind: input, shape index: {}]
  %s4 = inlined_call_operand.vmem [shape: f32[1,128], index: 4, kind: input, shape index: {}]
  %s5 = inlined_call_operand.hbm [shape: f32[128,128], index: 5, kind: output, shape index: {}]
  %s6 = sld [smem:[#allocation0]]
  $region69: #{tpu_custom_call.1} parent=0
    _
  %s8 = ssub.s32 1, %s6
  %s9 = scalar_select 0, %s8, %s6
  $region1: #{tpu_custom_call.1} parent=0
    #allocation2 [shape = 'u8[65536]{0}', space=vmem, size = 0x10000, scoped, tag = 'input window, operand 0']
    #allocation3 [shape = 's32[2]{0}', space=sflag, size = 0x8, scoped, tag = 'scoped memory for tpu_custom_call.1']
    #allocation4 [shape = 's32[2]{0}', space=sflag, size = 0x8, scoped, tag = 'scoped memory for tpu_custom_call.1']
    #allocation5 [shape = 'u8[131072]{0}', space=vmem, size = 0x20000, scoped, tag = 'input window, operand 1, single buffered']
    #allocation6 [shape = 's32[1]{0}', space=sflag, size = 0x4, scoped, tag = 'scoped memory for tpu_custom_call.1']
    #allocation7 [shape = 'u8[1024]{0}', space=vmem, size = 0x400, scoped, tag = 'input window, operand 2, single buffered']
    #allocation8 [shape = 'u8[131072]{0}', space=vmem, size = 0x20000, scoped, tag = 'input window, operand 3, single buffered']
    #allocation9 [shape = 's32[1]{0}', space=sflag, size = 0x4, scoped, tag = 'scoped memory for tpu_custom_call.1']
    #allocation10 [shape = 'u8[65536]{0}', space=vmem, size = 0x10000, scoped, tag = 'output window, operand 0']
    %10 = vsyncpa [#allocation3], 0
    %s11 = scalar_lea.sflag [#allocation3], 1
    %12 = vsyncpa %s11, 0
    %13 = vsyncpa [#allocation6], 0
    %14 = vsyncpa [#allocation9], 0
    %15 = vsyncpa [#allocation4], 0
    %s16 = scalar_lea.sflag [#allocation4], 1
    %17 = vsyncpa %s16, 0
    loop: start=0, step=1, limit=4
    $region2: #{tpu_custom_call.1} parent=1 // loop_pre_header
      _
    $region3: #{tpu_custom_call.1} parent=1 // loop_header
      %s19 = sphi 0, %s23
      %p20 = scmp.ge.s32.totalorder %s19, 4
      %s29 = sphi 0, %s31
      %s32 = sphi 0, %s29
      %s33 = sphi 0, %s32
      %s49 = sphi 0, %s33
      %s53 = sphi 0, %s53
      %s55 = sphi 0, %s53
      %s56 = sphi 0, %s55
      %s70 = sphi 0, %s56
      %s74 = sphi 0, %s74
      %s76 = sphi 0, %s74
      %s77 = sphi 0, %s76
      %s91 = sphi 0, %s77
      %s95 = sphi 0, %s95
      %s97 = sphi 0, %s95
      %s98 = sphi 0, %s97
      %s112 = sphi 0, %s98
      %s116 = sphi 0, %s116
      %s118 = sphi 0, %s116
      %s119 = sphi 0, %s118
      %s133 = sphi 0, %s119
      %s139 = sphi 0, %s141
      %s142 = sphi 0, %s139
      %s143 = sphi 0, %s142
      %s159 = sphi 0, %s143
    $region4: #{tpu_custom_call.1} parent=1 // loop_header_branch
      %22 = sbr.rel (%p20) target = $region8
    $region5: #{tpu_custom_call.1} parent=1 // loop_body
      %s24 = ssub.s32 %s19, 1
      %s25 = ssub.s32 %s19, 2
      %s26 = sadd.s32 %s19, 1
      %s27 = ssub.s32 %s19, %s26
      %p28 = scmp.eq.s32.totalorder %s27, 0
      %s30 = sadd.s32 %s29, 1
      %s31 = scalar_select %p28, %s29, %s30
      %p34 = pneg %p28
      %p35 = scmp.eq.s32.totalorder %s19, 1
      %p36 = por %p34, %p35
      %p37 = scmp.ne.s32.totalorder %s29, %s32
      %p38 = scmp.eq.s32.totalorder %s19, 0
      %p39 = por %p37, %p38
      %p40 = scmp.ne.s32.totalorder %s29, %s32
      %p41 = scmp.eq.s32.totalorder %s24, 1
      %p42 = por %p40, %p41
      %p43 = scmp.ne.s32.totalorder %s32, %s33
      %p44 = scmp.eq.s32.totalorder %s24, 0
      %p45 = por %p43, %p44
      %p46 = scmp.ne.s32.totalorder %s32, %s33
      %p47 = scmp.eq.s32.totalorder %s25, 1
      %p48 = por %p46, %p47
      %p50 = scmp.ne.s32.totalorder %s33, %s49
      %p51 = scmp.eq.s32.totalorder %s25, 0
      %p52 = por %p50, %p51
      %s54 = sadd.s32 %s53, 1
      %p57 = scmp.eq.s32.totalorder %s19, 1
      %p58 = scmp.ne.s32.totalorder %s53, %s55
      %p59 = scmp.eq.s32.totalorder %s19, 0
      %p60 = por %p58, %p59
      %p61 = scmp.ne.s32.totalorder %s53, %s55
      %p62 = scmp.eq.s32.totalorder %s24, 1
      %p63 = por %p61, %p62
      %p64 = scmp.ne.s32.totalorder %s55, %s56
      %p65 = scmp.eq.s32.totalorder %s24, 0
      %p66 = por %p64, %p65
      %p67 = scmp.ne.s32.totalorder %s55, %s56
      %p68 = scmp.eq.s32.totalorder %s25, 1
      %p69 = por %p67, %p68
      %p71 = scmp.ne.s32.totalorder %s56, %s70
      %p72 = scmp.eq.s32.totalorder %s25, 0
      %p73 = por %p71, %p72
      %s75 = sadd.s32 %s74, 1
      %p78 = scmp.eq.s32.totalorder %s19, 1
      %p79 = scmp.ne.s32.totalorder %s74, %s76
      %p80 = scmp.eq.s32.totalorder %s19, 0
      %p81 = por %p79, %p80
      %p82 = scmp.ne.s32.totalorder %s74, %s76
      %p83 = scmp.eq.s32.totalorder %s24, 1
      %p84 = por %p82, %p83
      %p85 = scmp.ne.s32.totalorder %s76, %s77
      %p86 = scmp.eq.s32.totalorder %s24, 0
      %p87 = por %p85, %p86
      %p88 = scmp.ne.s32.totalorder %s76, %s77
      %p89 = scmp.eq.s32.totalorder %s25, 1
      %p90 = por %p88, %p89
      %p92 = scmp.ne.s32.totalorder %s77, %s91
      %p93 = scmp.eq.s32.totalorder %s25, 0
      %p94 = por %p92, %p93
      %s96 = sadd.s32 %s95, 1
      %p99 = scmp.eq.s32.totalorder %s19, 1
      %p100 = scmp.ne.s32.totalorder %s95, %s97
      %p101 = scmp.eq.s32.totalorder %s19, 0
      %p102 = por %p100, %p101
      %p103 = scmp.ne.s32.totalorder %s95, %s97
      %p104 = scmp.eq.s32.totalorder %s24, 1
      %p105 = por %p103, %p104
      %p106 = scmp.ne.s32.totalorder %s97, %s98
      %p107 = scmp.eq.s32.totalorder %s24, 0
      %p108 = por %p106, %p107
      %p109 = scmp.ne.s32.totalorder %s97, %s98
      %p110 = scmp.eq.s32.totalorder %s25, 1
      %p111 = por %p109, %p110
      %p113 = scmp.ne.s32.totalorder %s98, %s112
      %p114 = scmp.eq.s32.totalorder %s25, 0
      %p115 = por %p113, %p114
      %s117 = sadd.s32 %s116, 1
      %p120 = scmp.eq.s32.totalorder %s19, 1
      %p121 = scmp.ne.s32.totalorder %s116, %s118
      %p122 = scmp.eq.s32.totalorder %s19, 0
      %p123 = por %p121, %p122
      %p124 = scmp.ne.s32.totalorder %s116, %s118
      %p125 = scmp.eq.s32.totalorder %s24, 1
      %p126 = por %p124, %p125
      %p127 = scmp.ne.s32.totalorder %s118, %s119
      %p128 = scmp.eq.s32.totalorder %s24, 0
      %p129 = por %p127, %p128
      %p130 = scmp.ne.s32.totalorder %s118, %s119
      %p131 = scmp.eq.s32.totalorder %s25, 1
      %p132 = por %p130, %p131
      %p134 = scmp.ne.s32.totalorder %s119, %s133
      %p135 = scmp.eq.s32.totalorder %s25, 0
      %p136 = por %p134, %p135
      %s137 = ssub.s32 %s19, %s26
      %p138 = scmp.eq.s32.totalorder %s137, 0
      %s140 = sadd.s32 %s139, 1
      %s141 = scalar_select %p138, %s139, %s140
      %p144 = pneg %p138
      %p145 = scmp.eq.s32.totalorder %s19, 1
      %p146 = por %p144, %p145
      %p147 = scmp.ne.s32.totalorder %s139, %s142
      %p148 = scmp.eq.s32.totalorder %s19, 0
      %p149 = por %p147, %p148
      %p150 = scmp.ne.s32.totalorder %s139, %s142
      %p151 = scmp.eq.s32.totalorder %s24, 1
      %p152 = por %p150, %p151
      %p153 = scmp.ne.s32.totalorder %s142, %s143
      %p154 = scmp.eq.s32.totalorder %s24, 0
      %p155 = por %p153, %p154
      %p156 = scmp.ne.s32.totalorder %s142, %s143
      %p157 = scmp.eq.s32.totalorder %s25, 1
      %p158 = por %p156, %p157
      %p160 = scmp.ne.s32.totalorder %s143, %s159
      %p161 = scmp.eq.s32.totalorder %s25, 0
      %p162 = por %p160, %p161
      %p163 = scmp.le.s32.totalorder 1, %s19
      %p164 = scmp.lt.s32.totalorder %s19, 3
      %p165 = pnand %p163, %p164
      %p166 = pneg %p165
      // Predicated region
      $region9: #{tpu_custom_call.1} parent=5 // pred_check
        _
      $region10: #{tpu_custom_call.1} parent=5 // pred_check_branch
        %168 = sbr.rel (%p165) target = $region12
      $region11: #{tpu_custom_call.1} parent=5 // pred_region
        %s169 = ssub.s32 %s19, 1
        // Predicated region
        $region13: #{tpu_custom_call.1} parent=11 // pred_check
          %p170 = pneg %p66
        $region14: #{tpu_custom_call.1} parent=11 // pred_check_branch
          %172 = sbr.rel (%p170) target = $region16
        $region15: #{tpu_custom_call.1} parent=11 // pred_region
          %174 = vsyncadd [#allocation6], 0
          %s175 = sshll.u32 %s1, 4
          %s176 = int_to_ptr.hbm [resolvable:$true] %s175
          %s177 = sshll.u32 [#allocation5], 4
          %s178 = int_to_ptr.vmem [resolvable:$true] %s177
          %183 = dma.hbm_to_vmem [thread:$0]  %s176, 4096, %s178, [#allocation6], 256, 256, 16
        $region16: #{tpu_custom_call.1} parent=11 // pred_fallthru
          _
        // Predicated region
        $region17: #{tpu_custom_call.1} parent=11 // pred_check
          %p184 = pneg %p87
        $region18: #{tpu_custom_call.1} parent=11 // pred_check_branch
          %186 = sbr.rel (%p184) target = $region20
        $region19: #{tpu_custom_call.1} parent=11 // pred_region
          %188 = vsyncadd [#allocation6], 0
          %s190 = sshll.u32 %s2, 4
          %s191 = int_to_ptr.hbm [resolvable:$true] %s190
          %s192 = sshll.u32 [#allocation7], 4
          %s193 = int_to_ptr.vmem [resolvable:$true] %s192
          %195 = dma.hbm_to_vmem [thread:$0]  %s191, 32, %s193, [#allocation6]
        $region20: #{tpu_custom_call.1} parent=11 // pred_fallthru
          _
        // Predicated region
        $region21: #{tpu_custom_call.1} parent=11 // pred_check
          %p196 = pneg %p108
        $region22: #{tpu_custom_call.1} parent=11 // pred_check_branch
          %198 = sbr.rel (%p196) target = $region24
        $region23: #{tpu_custom_call.1} parent=11 // pred_region
          %200 = vsyncadd [#allocation9], 0
          %s201 = sshll.u32 %s3, 4
          %s202 = int_to_ptr.hbm [resolvable:$true] %s201
          %s203 = sshll.u32 [#allocation8], 4
          %s204 = int_to_ptr.vmem [resolvable:$true] %s203
          %209 = dma.hbm_to_vmem [thread:$0]  %s202, 4096, %s204, [#allocation9], 128, 128, 8
        $region24: #{tpu_custom_call.1} parent=11 // pred_fallthru
          _
        // Predicated region
        $region25: #{tpu_custom_call.1} parent=11 // pred_check
          %p210 = pneg %p129
        $region26: #{tpu_custom_call.1} parent=11 // pred_check_branch
          %212 = sbr.rel (%p210) target = $region28
        $region27: #{tpu_custom_call.1} parent=11 // pred_region
          _
        $region28: #{tpu_custom_call.1} parent=11 // pred_fallthru
          _
      $region12: #{tpu_custom_call.1} parent=5 // pred_fallthru
        _
      %p213 = scmp.lt.s32.totalorder %s19, 2
      // Predicated region
      $region29: #{tpu_custom_call.1} parent=5 // pred_check
        %p214 = pneg %p213
      $region30: #{tpu_custom_call.1} parent=5 // pred_check_branch
        %216 = sbr.rel (%p214) target = $region32
      $region31: #{tpu_custom_call.1} parent=5 // pred_region
        // Predicated region
        $region33: #{tpu_custom_call.1} parent=31 // pred_check
          %p217 = pneg %p39
        $region34: #{tpu_custom_call.1} parent=31 // pred_check_branch
          %219 = sbr.rel (%p217) target = $region36
        $region35: #{tpu_custom_call.1} parent=31 // pred_region
          %s220 = sand.u32 %s29, 1
          %s221 = scalar_lea.sflag [#allocation3], %s220
          %s222 = sand.u32 %s29, 1
          %s223 = smul.addr %s222, 64
          %s224 = scalar_lea.vmem [#allocation2], %s223
          %s225 = smul.u32 8, %s19
          %227 = vsyncadd %s221, 0
          %s228 = smul.addr %s225, 8
          %s229 = scalar_lea.hbm %s0, %s228
          %s230 = sshll.u32 %s229, 4
          %s231 = int_to_ptr.hbm [resolvable:$true] %s230
          %s232 = sshll.u32 %s224, 4
          %s233 = int_to_ptr.vmem [resolvable:$true] %s232
          %238 = dma.hbm_to_vmem [thread:$0]  %s231, 1024, %s233, %s221, 128, 128, 8
        $region36: #{tpu_custom_call.1} parent=31 // pred_fallthru
          _
      $region32: #{tpu_custom_call.1} parent=5 // pred_fallthru
        _
      %p239 = scmp.le.s32.totalorder 1, %s19
      %p240 = scmp.lt.s32.totalorder %s19, 3
      %p241 = pnand %p239, %p240
      %p242 = pneg %p241
      // Predicated region
      $region37: #{tpu_custom_call.1} parent=5 // pred_check
        _
      $region38: #{tpu_custom_call.1} parent=5 // pred_check_branch
        %244 = sbr.rel (%p241) target = $region40
      $region39: #{tpu_custom_call.1} parent=5 // pred_region
        %s245 = ssub.s32 %s19, 1
        %s246 = sand.u32 %s32, 1
        %s247 = scalar_lea.sflag [#allocation3], %s246
        %s248 = sand.u32 %s32, 1
        %s249 = smul.addr %s248, 64
        %s250 = scalar_lea.vmem [#allocation2], %s249
        // Predicated region
        $region41: #{tpu_custom_call.1} parent=39 // pred_check
          %p251 = pneg %p45
        $region42: #{tpu_custom_call.1} parent=39 // pred_check_branch
          %253 = sbr.rel (%p251) target = $region44
        $region43: #{tpu_custom_call.1} parent=39 // pred_region
          %255 = dma.done %s247, 1024
        $region44: #{tpu_custom_call.1} parent=39 // pred_fallthru
          _
        // Predicated region
        $region45: #{tpu_custom_call.1} parent=39 // pred_check
          %p256 = pneg %p66
        $region46: #{tpu_custom_call.1} parent=39 // pred_check_branch
          %258 = sbr.rel (%p256) target = $region48
        $region47: #{tpu_custom_call.1} parent=39 // pred_region
          %260 = dma.done [#allocation6], 4096
        $region48: #{tpu_custom_call.1} parent=39 // pred_fallthru
          _
        // Predicated region
        $region49: #{tpu_custom_call.1} parent=39 // pred_check
          %p261 = pneg %p87
        $region50: #{tpu_custom_call.1} parent=39 // pred_check_branch
          %263 = sbr.rel (%p261) target = $region52
        $region51: #{tpu_custom_call.1} parent=39 // pred_region
          %265 = dma.done [#allocation6], 32
        $region52: #{tpu_custom_call.1} parent=39 // pred_fallthru
          _
        // Predicated region
        $region53: #{tpu_custom_call.1} parent=39 // pred_check
          %p266 = pneg %p108
        $region54: #{tpu_custom_call.1} parent=39 // pred_check_branch
          %268 = sbr.rel (%p266) target = $region56
        $region55: #{tpu_custom_call.1} parent=39 // pred_region
          %270 = dma.done [#allocation9], 4096
        $region56: #{tpu_custom_call.1} parent=39 // pred_fallthru
          _
        %s271 = sand.u32 %s32, 1
        %s272 = scalar_lea.sflag [#allocation3], %s271
        %s273 = sand.u32 %s32, 1
        %s274 = smul.addr %s273, 64
        %s275 = scalar_lea.vmem [#allocation2], %s274
        %p276 = pneg %p45
        %p277 = pneg %p42
        %p278 = pneg %p66
        %p279 = pneg %p63
        %p280 = pneg %p87
        %p281 = pneg %p84
        %p282 = pneg %p108
        %p283 = pneg %p105
        %p284 = pneg %p129
        %p285 = pneg %p126
        %p286 = pneg %p155
        %p287 = pneg %p152
        %s288 = sand.u32 %s142, 1
        %s289 = scalar_lea.sflag [#allocation4], %s288
        %s290 = sand.u32 %s142, 1
        %s291 = smul.addr %s290, 64
        %s292 = scalar_lea.vmem [#allocation10], %s291
        %s293 = smul.u32 8, %s24
        %s294 = smul.u32 8, %s24
        %v295 = vld [vmem:[%s250] sm:$0xff]
        %v296 = vld [vmem:[%s250 + $0x8] sm:$0xff]
        %v297 = vld [vmem:[%s250 + $0x10] sm:$0xff]
        %v298 = vld [vmem:[%s250 + $0x18] sm:$0xff]
        %v299 = vld [vmem:[%s250 + $0x20] sm:$0xff]
        %v300 = vld [vmem:[%s250 + $0x28] sm:$0xff]
        %v301 = vld [vmem:[%s250 + $0x30] sm:$0xff]
        %v302 = vld [vmem:[%s250 + $0x38] sm:$0xff]
        %v303 = vld [vmem:[#allocation5] sm:$0xff]
        %v304 = vld [vmem:[#allocation5 + $0x8] sm:$0xff]
        %v305 = vld [vmem:[#allocation5 + $0x10] sm:$0xff]
        %v306 = vld [vmem:[#allocation5 + $0x18] sm:$0xff]
        %v307 = vld [vmem:[#allocation5 + $0x20] sm:$0xff]
        %v308 = vld [vmem:[#allocation5 + $0x28] sm:$0xff]
        %v309 = vld [vmem:[#allocation5 + $0x30] sm:$0xff]
        %v310 = vld [vmem:[#allocation5 + $0x38] sm:$0xff]
        %v311 = vld [vmem:[#allocation5 + $0x40] sm:$0xff]
        %v312 = vld [vmem:[#allocation5 + $0x48] sm:$0xff]
        %v313 = vld [vmem:[#allocation5 + $0x50] sm:$0xff]
        %v314 = vld [vmem:[#allocation5 + $0x58] sm:$0xff]
        %v315 = vld [vmem:[#allocation5 + $0x60] sm:$0xff]
        %v316 = vld [vmem:[#allocation5 + $0x68] sm:$0xff]
        %v317 = vld [vmem:[#allocation5 + $0x70] sm:$0xff]
        %v318 = vld [vmem:[#allocation5 + $0x78] sm:$0xff]
        %v319 = vld [vmem:[#allocation5 + $0x80] sm:$0xff]
        %v320 = vld [vmem:[#allocation5 + $0x88] sm:$0xff]
        %v321 = vld [vmem:[#allocation5 + $0x90] sm:$0xff]
        %v322 = vld [vmem:[#allocation5 + $0x98] sm:$0xff]
        %v323 = vld [vmem:[#allocation5 + $0xa0] sm:$0xff]
        %v324 = vld [vmem:[#allocation5 + $0xa8] sm:$0xff]
        %v325 = vld [vmem:[#allocation5 + $0xb0] sm:$0xff]
        %v326 = vld [vmem:[#allocation5 + $0xb8] sm:$0xff]
        %v327 = vld [vmem:[#allocation5 + $0xc0] sm:$0xff]
        %v328 = vld [vmem:[#allocation5 + $0xc8] sm:$0xff]
        %v329 = vld [vmem:[#allocation5 + $0xd0] sm:$0xff]
        %v330 = vld [vmem:[#allocation5 + $0xd8] sm:$0xff]
        %v331 = vld [vmem:[#allocation5 + $0xe0] sm:$0xff]
        %v332 = vld [vmem:[#allocation5 + $0xe8] sm:$0xff]
        %v333 = vld [vmem:[#allocation5 + $0xf0] sm:$0xff]
        %v334 = vld [vmem:[#allocation5 + $0xf8] sm:$0xff]
        %v335 = vld [vmem:[#allocation7] sm:$0x3]
        %v337 = vperm.slane %v335, 0
        %v338 = vperm.slane %v335, 1
        %341 = vmatpush.msra.mxu0 %v333
        %342 = vmatpush.msra.mxu0 %v331
        %343 = vmatpush.msra.mxu0 %v329
        %344 = vmatpush.msra.mxu0 %v327
        %345 = vmatpush.msra.mxu0 %v325
        %346 = vmatpush.msra.mxu0 %v323
        %347 = vmatpush.msra.mxu0 %v321
        %348 = vmatpush.msra.mxu0 %v319
        %349 = vmatpush.msra.mxu0 %v317
        %350 = vmatpush.msra.mxu0 %v315
        %351 = vmatpush.msra.mxu0 %v313
        %352 = vmatpush.msra.mxu0 %v311
        %353 = vmatpush.msra.mxu0 %v309
        %354 = vmatpush.msra.mxu0 %v307
        %355 = vmatpush.msra.mxu0 %v305
        %356 = vmatpush.msra.mxu0 %v303
        %357 = vmatmul.f32.gmra.mxu0 %v295
        %v358 = vpop.f32.mrf.mxu0
        %v359 = vadd.f32 %v337, %v358
        %360 = vmatmul.f32.gmra.mxu0 %v296
        %v361 = vpop.f32.mrf.mxu0
        %v362 = vadd.f32 %v337, %v361
        %363 = vmatmul.f32.gmra.mxu0 %v297
        %v364 = vpop.f32.mrf.mxu0
        %v365 = vadd.f32 %v337, %v364
        %366 = vmatmul.f32.gmra.mxu0 %v298
        %v367 = vpop.f32.mrf.mxu0
        %v368 = vadd.f32 %v337, %v367
        %369 = vmatmul.f32.gmra.mxu0 %v299
        %v370 = vpop.f32.mrf.mxu0
        %v371 = vadd.f32 %v337, %v370
        %372 = vmatmul.f32.gmra.mxu0 %v300
        %v373 = vpop.f32.mrf.mxu0
        %v374 = vadd.f32 %v337, %v373
        %375 = vmatmul.f32.gmra.mxu0 %v301
        %v376 = vpop.f32.mrf.mxu0
        %v377 = vadd.f32 %v337, %v376
        %378 = vmatmul.f32.gmra.mxu0 %v302
        %v379 = vpop.f32.mrf.mxu0
        %v380 = vadd.f32 %v337, %v379
        %381 = vdwg.mxu0
        %382 = vmatpush.msra.mxu0 %v334
        %383 = vmatpush.msra.mxu0 %v332
        %384 = vmatpush.msra.mxu0 %v330
        %385 = vmatpush.msra.mxu0 %v328
        %386 = vmatpush.msra.mxu0 %v326
        %387 = vmatpush.msra.mxu0 %v324
        %388 = vmatpush.msra.mxu0 %v322
        %389 = vmatpush.msra.mxu0 %v320
        %390 = vmatpush.msra.mxu0 %v318
        %391 = vmatpush.msra.mxu0 %v316
        %392 = vmatpush.msra.mxu0 %v314
        %393 = vmatpush.msra.mxu0 %v312
        %394 = vmatpush.msra.mxu0 %v310
        %395 = vmatpush.msra.mxu0 %v308
        %396 = vmatpush.msra.mxu0 %v306
        %397 = vmatpush.msra.mxu0 %v304
        %398 = vmatmul.f32.gmra.mxu0 %v295
        %v399 = vpop.f32.mrf.mxu0
        %v400 = vadd.f32 %v338, %v399
        %401 = vmatmul.f32.gmra.mxu0 %v296
        %v402 = vpop.f32.mrf.mxu0
        %v403 = vadd.f32 %v338, %v402
        %404 = vmatmul.f32.gmra.mxu0 %v297
        %v405 = vpop.f32.mrf.mxu0
        %v406 = vadd.f32 %v338, %v405
        %407 = vmatmul.f32.gmra.mxu0 %v298
        %v408 = vpop.f32.mrf.mxu0
        %v409 = vadd.f32 %v338, %v408
        %410 = vmatmul.f32.gmra.mxu0 %v299
        %v411 = vpop.f32.mrf.mxu0
        %v412 = vadd.f32 %v338, %v411
        %413 = vmatmul.f32.gmra.mxu0 %v300
        %v414 = vpop.f32.mrf.mxu0
        %v415 = vadd.f32 %v338, %v414
        %416 = vmatmul.f32.gmra.mxu0 %v301
        %v417 = vpop.f32.mrf.mxu0
        %v418 = vadd.f32 %v338, %v417
        %419 = vmatmul.f32.gmra.mxu0 %v302
        %v420 = vpop.f32.mrf.mxu0
        %v421 = vadd.f32 %v338, %v420
        %422 = vdwg.mxu0
        %vm423 = vcmp.ge.f32.partialorder %v359, 0.0
        %vm424 = vcmp.ge.f32.partialorder %v400, 0.0
        %vm425 = vcmp.ge.f32.partialorder %v362, 0.0
        %vm426 = vcmp.ge.f32.partialorder %v403, 0.0
        %vm427 = vcmp.ge.f32.partialorder %v365, 0.0
        %vm428 = vcmp.ge.f32.partialorder %v406, 0.0
        %vm429 = vcmp.ge.f32.partialorder %v368, 0.0
        %vm430 = vcmp.ge.f32.partialorder %v409, 0.0
        %vm431 = vcmp.ge.f32.partialorder %v371, 0.0
        %vm432 = vcmp.ge.f32.partialorder %v412, 0.0
        %vm433 = vcmp.ge.f32.partialorder %v374, 0.0
        %vm434 = vcmp.ge.f32.partialorder %v415, 0.0
        %vm435 = vcmp.ge.f32.partialorder %v377, 0.0
        %vm436 = vcmp.ge.f32.partialorder %v418, 0.0
        %vm437 = vcmp.ge.f32.partialorder %v380, 0.0
        %vm438 = vcmp.ge.f32.partialorder %v421, 0.0
        %v439 = vmul.f32 %v359, 0.01
        %v440 = vmul.f32 %v400, 0.01
        %v441 = vmul.f32 %v362, 0.01
        %v442 = vmul.f32 %v403, 0.01
        %v443 = vmul.f32 %v365, 0.01
        %v444 = vmul.f32 %v406, 0.01
        %v445 = vmul.f32 %v368, 0.01
        %v446 = vmul.f32 %v409, 0.01
        %v447 = vmul.f32 %v371, 0.01
        %v448 = vmul.f32 %v412, 0.01
        %v449 = vmul.f32 %v374, 0.01
        %v450 = vmul.f32 %v415, 0.01
        %v451 = vmul.f32 %v377, 0.01
        %v452 = vmul.f32 %v418, 0.01
        %v453 = vmul.f32 %v380, 0.01
        %v454 = vmul.f32 %v421, 0.01
        %v455 = vsel %vm423, %v359, %v439
        %v456 = vsel %vm424, %v400, %v440
        %v457 = vsel %vm425, %v362, %v441
        %v458 = vsel %vm426, %v403, %v442
        %v459 = vsel %vm427, %v365, %v443
        %v460 = vsel %vm428, %v406, %v444
        %v461 = vsel %vm429, %v368, %v445
        %v462 = vsel %vm430, %v409, %v446
        %v463 = vsel %vm431, %v371, %v447
        %v464 = vsel %vm432, %v412, %v448
        %v465 = vsel %vm433, %v374, %v449
        %v466 = vsel %vm434, %v415, %v450
        %v467 = vsel %vm435, %v377, %v451
        %v468 = vsel %vm436, %v418, %v452
        %v469 = vsel %vm437, %v380, %v453
        %v470 = vsel %vm438, %v421, %v454
        %v471 = vld [vmem:[#allocation8] sm:$0xff]
        %v472 = vld [vmem:[#allocation8 + $0x8] sm:$0xff]
        %v473 = vld [vmem:[#allocation8 + $0x10] sm:$0xff]
        %v474 = vld [vmem:[#allocation8 + $0x18] sm:$0xff]
        %v475 = vld [vmem:[#allocation8 + $0x20] sm:$0xff]
        %v476 = vld [vmem:[#allocation8 + $0x28] sm:$0xff]
        %v477 = vld [vmem:[#allocation8 + $0x30] sm:$0xff]
        %v478 = vld [vmem:[#allocation8 + $0x38] sm:$0xff]
        %v479 = vld [vmem:[#allocation8 + $0x40] sm:$0xff]
        %v480 = vld [vmem:[#allocation8 + $0x48] sm:$0xff]
        %v481 = vld [vmem:[#allocation8 + $0x50] sm:$0xff]
        %v482 = vld [vmem:[#allocation8 + $0x58] sm:$0xff]
        %v483 = vld [vmem:[#allocation8 + $0x60] sm:$0xff]
        %v484 = vld [vmem:[#allocation8 + $0x68] sm:$0xff]
        %v485 = vld [vmem:[#allocation8 + $0x70] sm:$0xff]
        %v486 = vld [vmem:[#allocation8 + $0x78] sm:$0xff]
        %v487 = vld [vmem:[#allocation8 + $0x80] sm:$0xff]
        %v488 = vld [vmem:[#allocation8 + $0x88] sm:$0xff]
        %v489 = vld [vmem:[#allocation8 + $0x90] sm:$0xff]
        %v490 = vld [vmem:[#allocation8 + $0x98] sm:$0xff]
        %v491 = vld [vmem:[#allocation8 + $0xa0] sm:$0xff]
        %v492 = vld [vmem:[#allocation8 + $0xa8] sm:$0xff]
        %v493 = vld [vmem:[#allocation8 + $0xb0] sm:$0xff]
        %v494 = vld [vmem:[#allocation8 + $0xb8] sm:$0xff]
        %v495 = vld [vmem:[#allocation8 + $0xc0] sm:$0xff]
        %v496 = vld [vmem:[#allocation8 + $0xc8] sm:$0xff]
        %v497 = vld [vmem:[#allocation8 + $0xd0] sm:$0xff]
        %v498 = vld [vmem:[#allocation8 + $0xd8] sm:$0xff]
        %v499 = vld [vmem:[#allocation8 + $0xe0] sm:$0xff]
        %v500 = vld [vmem:[#allocation8 + $0xe8] sm:$0xff]
        %v501 = vld [vmem:[#allocation8 + $0xf0] sm:$0xff]
        %v502 = vld [vmem:[#allocation8 + $0xf8] sm:$0xff]
        %v503 = vld [vmem:[%s4] sm:$0x1]
        %v505 = vperm.slane %v503, 0
        %507 = vmatpush.msra.mxu0 %v486
        %508 = vmatpush.msra.mxu0 %v485
        %509 = vmatpush.msra.mxu0 %v484
        %510 = vmatpush.msra.mxu0 %v483
        %511 = vmatpush.msra.mxu0 %v482
        %512 = vmatpush.msra.mxu0 %v481
        %513 = vmatpush.msra.mxu0 %v480
        %514 = vmatpush.msra.mxu0 %v479
        %515 = vmatpush.msra.mxu0 %v478
        %516 = vmatpush.msra.mxu0 %v477
        %517 = vmatpush.msra.mxu0 %v476
        %518 = vmatpush.msra.mxu0 %v475
        %519 = vmatpush.msra.mxu0 %v474
        %520 = vmatpush.msra.mxu0 %v473
        %521 = vmatpush.msra.mxu0 %v472
        %522 = vmatpush.msra.mxu0 %v471
        %523 = vmatmul.f32.gmra.mxu0 %v455
        %v524 = vpop.f32.mrf.mxu0
        %v525 = vadd.f32 %v505, %v524
        %526 = vmatmul.f32.gmra.mxu0 %v457
        %v527 = vpop.f32.mrf.mxu0
        %v528 = vadd.f32 %v505, %v527
        %529 = vmatmul.f32.gmra.mxu0 %v459
        %v530 = vpop.f32.mrf.mxu0
        %v531 = vadd.f32 %v505, %v530
        %532 = vmatmul.f32.gmra.mxu0 %v461
        %v533 = vpop.f32.mrf.mxu0
        %v534 = vadd.f32 %v505, %v533
        %535 = vmatmul.f32.gmra.mxu0 %v463
        %v536 = vpop.f32.mrf.mxu0
        %v537 = vadd.f32 %v505, %v536
        %538 = vmatmul.f32.gmra.mxu0 %v465
        %v539 = vpop.f32.mrf.mxu0
        %v540 = vadd.f32 %v505, %v539
        %541 = vmatmul.f32.gmra.mxu0 %v467
        %v542 = vpop.f32.mrf.mxu0
        %v543 = vadd.f32 %v505, %v542
        %544 = vmatmul.f32.gmra.mxu0 %v469
        %v545 = vpop.f32.mrf.mxu0
        %v546 = vadd.f32 %v505, %v545
        %547 = vdwg.mxu0
        %548 = vmatpush.msra.mxu0 %v502
        %549 = vmatpush.msra.mxu0 %v501
        %550 = vmatpush.msra.mxu0 %v500
        %551 = vmatpush.msra.mxu0 %v499
        %552 = vmatpush.msra.mxu0 %v498
        %553 = vmatpush.msra.mxu0 %v497
        %554 = vmatpush.msra.mxu0 %v496
        %555 = vmatpush.msra.mxu0 %v495
        %556 = vmatpush.msra.mxu0 %v494
        %557 = vmatpush.msra.mxu0 %v493
        %558 = vmatpush.msra.mxu0 %v492
        %559 = vmatpush.msra.mxu0 %v491
        %560 = vmatpush.msra.mxu0 %v490
        %561 = vmatpush.msra.mxu0 %v489
        %562 = vmatpush.msra.mxu0 %v488
        %563 = vmatpush.msra.mxu0 %v487
        %564 = vmatmul.f32.gmra.mxu0 %v456
        %v565 = vpop.f32.mrf.mxu0
        %v566 = vadd.f32 %v525, %v565
        %567 = vmatmul.f32.gmra.mxu0 %v458
        %v568 = vpop.f32.mrf.mxu0
        %v569 = vadd.f32 %v528, %v568
        %570 = vmatmul.f32.gmra.mxu0 %v460
        %v571 = vpop.f32.mrf.mxu0
        %v572 = vadd.f32 %v531, %v571
        %573 = vmatmul.f32.gmra.mxu0 %v462
        %v574 = vpop.f32.mrf.mxu0
        %v575 = vadd.f32 %v534, %v574
        %576 = vmatmul.f32.gmra.mxu0 %v464
        %v577 = vpop.f32.mrf.mxu0
        %v578 = vadd.f32 %v537, %v577
        %579 = vmatmul.f32.gmra.mxu0 %v466
        %v580 = vpop.f32.mrf.mxu0
        %v581 = vadd.f32 %v540, %v580
        %582 = vmatmul.f32.gmra.mxu0 %v468
        %v583 = vpop.f32.mrf.mxu0
        %v584 = vadd.f32 %v543, %v583
        %585 = vmatmul.f32.gmra.mxu0 %v470
        %v586 = vpop.f32.mrf.mxu0
        %v587 = vadd.f32 %v546, %v586
        %588 = vdwg.mxu0
        %vm589 = vcmp.ge.f32.partialorder %v566, 0.0
        %vm590 = vcmp.ge.f32.partialorder %v569, 0.0
        %vm591 = vcmp.ge.f32.partialorder %v572, 0.0
        %vm592 = vcmp.ge.f32.partialorder %v575, 0.0
        %vm593 = vcmp.ge.f32.partialorder %v578, 0.0
        %vm594 = vcmp.ge.f32.partialorder %v581, 0.0
        %vm595 = vcmp.ge.f32.partialorder %v584, 0.0
        %vm596 = vcmp.ge.f32.partialorder %v587, 0.0
        %v597 = vmul.f32 %v566, 0.01
        %v598 = vmul.f32 %v569, 0.01
        %v599 = vmul.f32 %v572, 0.01
        %v600 = vmul.f32 %v575, 0.01
        %v601 = vmul.f32 %v578, 0.01
        %v602 = vmul.f32 %v581, 0.01
        %v603 = vmul.f32 %v584, 0.01
        %v604 = vmul.f32 %v587, 0.01
        %v605 = vsel %vm589, %v566, %v597
        %v606 = vsel %vm590, %v569, %v598
        %v607 = vsel %vm591, %v572, %v599
        %v608 = vsel %vm592, %v575, %v600
        %v609 = vsel %vm593, %v578, %v601
        %v610 = vsel %vm594, %v581, %v602
        %v611 = vsel %vm595, %v584, %v603
        %v612 = vsel %vm596, %v587, %v604
        %613 = vst [vmem:[%s292] sm:$0xff] %v605
        %614 = vst [vmem:[%s292 + $0x8] sm:$0xff] %v606
        %615 = vst [vmem:[%s292 + $0x10] sm:$0xff] %v607
        %616 = vst [vmem:[%s292 + $0x18] sm:$0xff] %v608
        %617 = vst [vmem:[%s292 + $0x20] sm:$0xff] %v609
        %618 = vst [vmem:[%s292 + $0x28] sm:$0xff] %v610
        %619 = vst [vmem:[%s292 + $0x30] sm:$0xff] %v611
        %620 = vst [vmem:[%s292 + $0x38] sm:$0xff] %v612
        %s621 = sand.u32 %s142, 1
        %s622 = scalar_lea.sflag [#allocation4], %s621
        %s623 = sand.u32 %s142, 1
        %s624 = smul.addr %s623, 64
        %s625 = scalar_lea.vmem [#allocation10], %s624
        // Predicated region
        $region57: #{tpu_custom_call.1} parent=39 // pred_check
          %p626 = pneg %p152
        $region58: #{tpu_custom_call.1} parent=39 // pred_check_branch
          %628 = sbr.rel (%p626) target = $region60
        $region59: #{tpu_custom_call.1} parent=39 // pred_region
          %s629 = smul.u32 8, %s24
          %631 = vsyncadd %s622, 0
          %s632 = smul.addr %s629, 8
          %s633 = scalar_lea.hbm %s5, %s632
          %s634 = sshll.u32 %s625, 4
          %s635 = int_to_ptr.vmem [resolvable:$true] %s634
          %s636 = sshll.u32 %s633, 4
          %s637 = int_to_ptr.hbm [resolvable:$true] %s636
          %642 = dma.vmem_to_hbm [thread:$0]  %s635, 1024, %s637, %s622, 128, 128, 8
        $region60: #{tpu_custom_call.1} parent=39 // pred_fallthru
          _
      $region40: #{tpu_custom_call.1} parent=5 // pred_fallthru
        _
      %p643 = scmp.le.s32.totalorder 2, %s19
      // Predicated region
      $region61: #{tpu_custom_call.1} parent=5 // pred_check
        %p644 = pneg %p643
      $region62: #{tpu_custom_call.1} parent=5 // pred_check_branch
        %646 = sbr.rel (%p644) target = $region64
      $region63: #{tpu_custom_call.1} parent=5 // pred_region
        %s647 = ssub.s32 %s19, 2
        // Predicated region
        $region65: #{tpu_custom_call.1} parent=63 // pred_check
          %p648 = pneg %p158
        $region66: #{tpu_custom_call.1} parent=63 // pred_check_branch
          %650 = sbr.rel (%p648) target = $region68
        $region67: #{tpu_custom_call.1} parent=63 // pred_region
          %s651 = sand.u32 %s143, 1
          %s652 = scalar_lea.sflag [#allocation4], %s651
          %s653 = sand.u32 %s143, 1
          %s654 = smul.addr %s653, 64
          %s655 = scalar_lea.vmem [#allocation10], %s654
          %657 = dma.done %s652, 1024
        $region68: #{tpu_custom_call.1} parent=63 // pred_fallthru
          _
      $region64: #{tpu_custom_call.1} parent=5 // pred_fallthru
        _
    $region6: #{tpu_custom_call.1} parent=1 // loop_footer
      %s23 = sadd.s32 1, %s19
    $region7: #{tpu_custom_call.1} parent=1 // loop_footer_branch
      %18 = sbr.rel target = $region3
    $region8: #{tpu_custom_call.1} parent=1 // loop_exit
      _
    %658 = vsyncpa [#allocation3], 1
    %s659 = scalar_lea.sflag [#allocation3], 1
    %660 = vsyncpa %s659, 1
    %661 = vsyncpa [#allocation6], 1
    %662 = vsyncpa [#allocation9], 1
    %663 = vsyncpa [#allocation4], 1
    %s664 = scalar_lea.sflag [#allocation4], 1
    %665 = vsyncpa %s664, 1

// kernel: tpu_custom_call.1
$region0: #{tpu_custom_call.1}
  #allocation0 [shape = 'u32[]', space=smem, size = 0x4, offset = 0x4, fixed_abs, tag = 'smem constant byte address 0x4 - core index']
  #allocation1 [shape = 'u32[72,128]{1,0:T(1,128)}', space=vmem, size = 0x9000, scoped, tag = 'internal scratch']
  %s0 = inlined_call_operand.hbm [shape: f32[128,128], index: 0, kind: input, shape index: {}]
  %s1 = inlined_call_operand.hbm [shape: f32[128,256], index: 1, kind: input, shape index: {}]
  %s2 = inlined_call_operand.hbm [shape: f32[1,256], index: 2, kind: input, shape index: {}]
  %s3 = inlined_call_operand.hbm [shape: f32[256,128], index: 3, kind: input, shape index: {}]
  %s4 = inlined_call_operand.vmem [shape: f32[1,128], index: 4, kind: input, shape index: {}]
  %s5 = inlined_call_operand.hbm [shape: f32[128,128], index: 5, kind: output, shape index: {}]
  %s6 = sld [smem:[#allocation0]]
  $region69: #{tpu_custom_call.1} parent=0
    _
  %s8 = ssub.s32 1, %s6
  %s9 = scalar_select 0, %s8, %s6
  $region1: #{tpu_custom_call.1} parent=0
    #allocation2 [shape = 'u8[65536]{0}', space=vmem, size = 0x10000, scoped, tag = 'input window, operand 0']
    #allocation3 [shape = 's32[2]{0}', space=sflag, size = 0x8, scoped, tag = 'scoped memory for tpu_custom_call.1']
    #allocation4 [shape = 's32[2]{0}', space=sflag, size = 0x8, scoped, tag = 'scoped memory for tpu_custom_call.1']
    #allocation5 [shape = 'u8[131072]{0}', space=vmem, size = 0x20000, scoped, tag = 'input window, operand 1, single buffered']
    #allocation6 [shape = 's32[1]{0}', space=sflag, size = 0x4, scoped, tag = 'scoped memory for tpu_custom_call.1']
    #allocation7 [shape = 'u8[1024]{0}', space=vmem, size = 0x400, scoped, tag = 'input window, operand 2, single buffered']
    #allocation8 [shape = 'u8[131072]{0}', space=vmem, size = 0x20000, scoped, tag = 'input window, operand 3, single buffered']
    #allocation9 [shape = 's32[1]{0}', space=sflag, size = 0x4, scoped, tag = 'scoped memory for tpu_custom_call.1']
    #allocation10 [shape = 'u8[65536]{0}', space=vmem, size = 0x10000, scoped, tag = 'output window, operand 0']
    %10 = vsyncpa [#allocation3], 0
    %s11 = scalar_lea.sflag [#allocation3], 1
    %12 = vsyncpa %s11, 0
    %13 = vsyncpa [#allocation6], 0
    %14 = vsyncpa [#allocation9], 0
    %15 = vsyncpa [#allocation4], 0
    %s16 = scalar_lea.sflag [#allocation4], 1
    %17 = vsyncpa %s16, 0
    loop: start=0, step=1, limit=4
    $region2: #{tpu_custom_call.1} parent=1 // loop_pre_header
      _
    $region3: #{tpu_custom_call.1} parent=1 // loop_header
      %s19 = sphi 0, %s23
      %p20 = scmp.ge.s32.totalorder %s19, 4
      %s29 = sphi 0, %s31
      %s32 = sphi 0, %s29
      %s33 = sphi 0, %s32
      %s49 = sphi 0, %s33
      %s53 = sphi 0, %s53
      %s55 = sphi 0, %s53
      %s56 = sphi 0, %s55
      %s70 = sphi 0, %s56
      %s74 = sphi 0, %s74
      %s76 = sphi 0, %s74
      %s77 = sphi 0, %s76
      %s91 = sphi 0, %s77
      %s95 = sphi 0, %s95
      %s97 = sphi 0, %s95
      %s98 = sphi 0, %s97
      %s112 = sphi 0, %s98
      %s116 = sphi 0, %s116
      %s118 = sphi 0, %s116
      %s119 = sphi 0, %s118
      %s133 = sphi 0, %s119
      %s139 = sphi 0, %s141
      %s142 = sphi 0, %s139
      %s143 = sphi 0, %s142
      %s159 = sphi 0, %s143
    $region4: #{tpu_custom_call.1} parent=1 // loop_header_branch
      %22 = sbr.rel (%p20) target = $region8
    $region5: #{tpu_custom_call.1} parent=1 // loop_body
      %s24 = ssub.s32 %s19, 1
      %s25 = ssub.s32 %s19, 2
      %s26 = sadd.s32 %s19, 1
      %s27 = ssub.s32 %s19, %s26
      %p28 = scmp.eq.s32.totalorder %s27, 0
      %s30 = sadd.s32 %s29, 1
      %s31 = scalar_select %p28, %s29, %s30
      %p34 = pneg %p28
      %p35 = scmp.eq.s32.totalorder %s19, 1
      %p36 = por %p34, %p35
      %p37 = scmp.ne.s32.totalorder %s29, %s32
      %p38 = scmp.eq.s32.totalorder %s19, 0
      %p39 = por %p37, %p38
      %p40 = scmp.ne.s32.totalorder %s29, %s32
      %p41 = scmp.eq.s32.totalorder %s24, 1
      %p42 = por %p40, %p41
      %p43 = scmp.ne.s32.totalorder %s32, %s33
      %p44 = scmp.eq.s32.totalorder %s24, 0
      %p45 = por %p43, %p44
      %p46 = scmp.ne.s32.totalorder %s32, %s33
      %p47 = scmp.eq.s32.totalorder %s25, 1
      %p48 = por %p46, %p47
      %p50 = scmp.ne.s32.totalorder %s33, %s49
      %p51 = scmp.eq.s32.totalorder %s25, 0
      %p52 = por %p50, %p51
      %s54 = sadd.s32 %s53, 1
      %p57 = scmp.eq.s32.totalorder %s19, 1
      %p58 = scmp.ne.s32.totalorder %s53, %s55
      %p59 = scmp.eq.s32.totalorder %s19, 0
      %p60 = por %p58, %p59
      %p61 = scmp.ne.s32.totalorder %s53, %s55
      %p62 = scmp.eq.s32.totalorder %s24, 1
      %p63 = por %p61, %p62
      %p64 = scmp.ne.s32.totalorder %s55, %s56
      %p65 = scmp.eq.s32.totalorder %s24, 0
      %p66 = por %p64, %p65
      %p67 = scmp.ne.s32.totalorder %s55, %s56
      %p68 = scmp.eq.s32.totalorder %s25, 1
      %p69 = por %p67, %p68
      %p71 = scmp.ne.s32.totalorder %s56, %s70
      %p72 = scmp.eq.s32.totalorder %s25, 0
      %p73 = por %p71, %p72
      %s75 = sadd.s32 %s74, 1
      %p78 = scmp.eq.s32.totalorder %s19, 1
      %p79 = scmp.ne.s32.totalorder %s74, %s76
      %p80 = scmp.eq.s32.totalorder %s19, 0
      %p81 = por %p79, %p80
      %p82 = scmp.ne.s32.totalorder %s74, %s76
      %p83 = scmp.eq.s32.totalorder %s24, 1
      %p84 = por %p82, %p83
      %p85 = scmp.ne.s32.totalorder %s76, %s77
      %p86 = scmp.eq.s32.totalorder %s24, 0
      %p87 = por %p85, %p86
      %p88 = scmp.ne.s32.totalorder %s76, %s77
      %p89 = scmp.eq.s32.totalorder %s25, 1
      %p90 = por %p88, %p89
      %p92 = scmp.ne.s32.totalorder %s77, %s91
      %p93 = scmp.eq.s32.totalorder %s25, 0
      %p94 = por %p92, %p93
      %s96 = sadd.s32 %s95, 1
      %p99 = scmp.eq.s32.totalorder %s19, 1
      %p100 = scmp.ne.s32.totalorder %s95, %s97
      %p101 = scmp.eq.s32.totalorder %s19, 0
      %p102 = por %p100, %p101
      %p103 = scmp.ne.s32.totalorder %s95, %s97
      %p104 = scmp.eq.s32.totalorder %s24, 1
      %p105 = por %p103, %p104
      %p106 = scmp.ne.s32.totalorder %s97, %s98
      %p107 = scmp.eq.s32.totalorder %s24, 0
      %p108 = por %p106, %p107
      %p109 = scmp.ne.s32.totalorder %s97, %s98
      %p110 = scmp.eq.s32.totalorder %s25, 1
      %p111 = por %p109, %p110
      %p113 = scmp.ne.s32.totalorder %s98, %s112
      %p114 = scmp.eq.s32.totalorder %s25, 0
      %p115 = por %p113, %p114
      %s117 = sadd.s32 %s116, 1
      %p120 = scmp.eq.s32.totalorder %s19, 1
      %p121 = scmp.ne.s32.totalorder %s116, %s118
      %p122 = scmp.eq.s32.totalorder %s19, 0
      %p123 = por %p121, %p122
      %p124 = scmp.ne.s32.totalorder %s116, %s118
      %p125 = scmp.eq.s32.totalorder %s24, 1
      %p126 = por %p124, %p125
      %p127 = scmp.ne.s32.totalorder %s118, %s119
      %p128 = scmp.eq.s32.totalorder %s24, 0
      %p129 = por %p127, %p128
      %p130 = scmp.ne.s32.totalorder %s118, %s119
      %p131 = scmp.eq.s32.totalorder %s25, 1
      %p132 = por %p130, %p131
      %p134 = scmp.ne.s32.totalorder %s119, %s133
      %p135 = scmp.eq.s32.totalorder %s25, 0
      %p136 = por %p134, %p135
      %s137 = ssub.s32 %s19, %s26
      %p138 = scmp.eq.s32.totalorder %s137, 0
      %s140 = sadd.s32 %s139, 1
      %s141 = scalar_select %p138, %s139, %s140
      %p144 = pneg %p138
      %p145 = scmp.eq.s32.totalorder %s19, 1
      %p146 = por %p144, %p145
      %p147 = scmp.ne.s32.totalorder %s139, %s142
      %p148 = scmp.eq.s32.totalorder %s19, 0
      %p149 = por %p147, %p148
      %p150 = scmp.ne.s32.totalorder %s139, %s142
      %p151 = scmp.eq.s32.totalorder %s24, 1
      %p152 = por %p150, %p151
      %p153 = scmp.ne.s32.totalorder %s142, %s143
      %p154 = scmp.eq.s32.totalorder %s24, 0
      %p155 = por %p153, %p154
      %p156 = scmp.ne.s32.totalorder %s142, %s143
      %p157 = scmp.eq.s32.totalorder %s25, 1
      %p158 = por %p156, %p157
      %p160 = scmp.ne.s32.totalorder %s143, %s159
      %p161 = scmp.eq.s32.totalorder %s25, 0
      %p162 = por %p160, %p161
      %p163 = scmp.le.s32.totalorder 1, %s19
      %p164 = scmp.lt.s32.totalorder %s19, 3
      %p165 = pnand %p163, %p164
      %p166 = pneg %p165
      // Predicated region
      $region9: #{tpu_custom_call.1} parent=5 // pred_check
        _
      $region10: #{tpu_custom_call.1} parent=5 // pred_check_branch
        %168 = sbr.rel (%p165) target = $region12
      $region11: #{tpu_custom_call.1} parent=5 // pred_region
        %s169 = ssub.s32 %s19, 1
        // Predicated region
        $region13: #{tpu_custom_call.1} parent=11 // pred_check
          %p170 = pneg %p66
        $region14: #{tpu_custom_call.1} parent=11 // pred_check_branch
          %172 = sbr.rel (%p170) target = $region16
        $region15: #{tpu_custom_call.1} parent=11 // pred_region
          %174 = vsyncadd [#allocation6], 0
          %s175 = sshll.u32 %s1, 4
          %s176 = int_to_ptr.hbm [resolvable:$true] %s175
          %s177 = sshll.u32 [#allocation5], 4
          %s178 = int_to_ptr.vmem [resolvable:$true] %s177
          %183 = dma.hbm_to_vmem [thread:$0]  %s176, 4096, %s178, [#allocation6], 256, 256, 16
        $region16: #{tpu_custom_call.1} parent=11 // pred_fallthru
          _
        // Predicated region
        $region17: #{tpu_custom_call.1} parent=11 // pred_check
          %p184 = pneg %p87
        $region18: #{tpu_custom_call.1} parent=11 // pred_check_branch
          %186 = sbr.rel (%p184) target = $region20
        $region19: #{tpu_custom_call.1} parent=11 // pred_region
          %188 = vsyncadd [#allocation6], 0
          %s190 = sshll.u32 %s2, 4
          %s191 = int_to_ptr.hbm [resolvable:$true] %s190
          %s192 = sshll.u32 [#allocation7], 4
          %s193 = int_to_ptr.vmem [resolvable:$true] %s192
          %195 = dma.hbm_to_vmem [thread:$0]  %s191, 32, %s193, [#allocation6]
        $region20: #{tpu_custom_call.1} parent=11 // pred_fallthru
          _
        // Predicated region
        $region21: #{tpu_custom_call.1} parent=11 // pred_check
          %p196 = pneg %p108
        $region22: #{tpu_custom_call.1} parent=11 // pred_check_branch
          %198 = sbr.rel (%p196) target = $region24
        $region23: #{tpu_custom_call.1} parent=11 // pred_region
          %200 = vsyncadd [#allocation9], 0
          %s201 = sshll.u32 %s3, 4
          %s202 = int_to_ptr.hbm [resolvable:$true] %s201
          %s203 = sshll.u32 [#allocation8], 4
          %s204 = int_to_ptr.vmem [resolvable:$true] %s203
          %209 = dma.hbm_to_vmem [thread:$0]  %s202, 4096, %s204, [#allocation9], 128, 128, 8
        $region24: #{tpu_custom_call.1} parent=11 // pred_fallthru
          _
        // Predicated region
        $region25: #{tpu_custom_call.1} parent=11 // pred_check
          %p210 = pneg %p129
        $region26: #{tpu_custom_call.1} parent=11 // pred_check_branch
          %212 = sbr.rel (%p210) target = $region28
        $region27: #{tpu_custom_call.1} parent=11 // pred_region
          _
        $region28: #{tpu_custom_call.1} parent=11 // pred_fallthru
          _
      $region12: #{tpu_custom_call.1} parent=5 // pred_fallthru
        _
      %p213 = scmp.lt.s32.totalorder %s19, 2
      // Predicated region
      $region29: #{tpu_custom_call.1} parent=5 // pred_check
        %p214 = pneg %p213
      $region30: #{tpu_custom_call.1} parent=5 // pred_check_branch
        %216 = sbr.rel (%p214) target = $region32
      $region31: #{tpu_custom_call.1} parent=5 // pred_region
        // Predicated region
        $region33: #{tpu_custom_call.1} parent=31 // pred_check
          %p217 = pneg %p39
        $region34: #{tpu_custom_call.1} parent=31 // pred_check_branch
          %219 = sbr.rel (%p217) target = $region36
        $region35: #{tpu_custom_call.1} parent=31 // pred_region
          %s220 = sand.u32 %s29, 1
          %s221 = scalar_lea.sflag [#allocation3], %s220
          %s222 = sand.u32 %s29, 1
          %s223 = smul.addr %s222, 64
          %s224 = scalar_lea.vmem [#allocation2], %s223
          %s225 = smul.u32 8, %s19
          %227 = vsyncadd %s221, 0
          %s228 = smul.addr %s225, 8
          %s229 = scalar_lea.hbm %s0, %s228
          %s230 = sshll.u32 %s229, 4
          %s231 = int_to_ptr.hbm [resolvable:$true] %s230
          %s232 = sshll.u32 %s224, 4
          %s233 = int_to_ptr.vmem [resolvable:$true] %s232
          %238 = dma.hbm_to_vmem [thread:$0]  %s231, 1024, %s233, %s221, 128, 128, 8
        $region36: #{tpu_custom_call.1} parent=31 // pred_fallthru
          _
      $region32: #{tpu_custom_call.1} parent=5 // pred_fallthru
        _
      %p239 = scmp.le.s32.totalorder 1, %s19
      %p240 = scmp.lt.s32.totalorder %s19, 3
      %p241 = pnand %p239, %p240
      %p242 = pneg %p241
      // Predicated region
      $region37: #{tpu_custom_call.1} parent=5 // pred_check
        _
      $region38: #{tpu_custom_call.1} parent=5 // pred_check_branch
        %244 = sbr.rel (%p241) target = $region40
      $region39: #{tpu_custom_call.1} parent=5 // pred_region
        %s245 = ssub.s32 %s19, 1
        %s246 = sand.u32 %s32, 1
        %s247 = scalar_lea.sflag [#allocation3], %s246
        %s248 = sand.u32 %s32, 1
        %s249 = smul.addr %s248, 64
        %s250 = scalar_lea.vmem [#allocation2], %s249
        // Predicated region
        $region41: #{tpu_custom_call.1} parent=39 // pred_check
          %p251 = pneg %p45
        $region42: #{tpu_custom_call.1} parent=39 // pred_check_branch
          %253 = sbr.rel (%p251) target = $region44
        $region43: #{tpu_custom_call.1} parent=39 // pred_region
          %255 = dma.done %s247, 1024
        $region44: #{tpu_custom_call.1} parent=39 // pred_fallthru
          _
        // Predicated region
        $region45: #{tpu_custom_call.1} parent=39 // pred_check
          %p256 = pneg %p66
        $region46: #{tpu_custom_call.1} parent=39 // pred_check_branch
          %258 = sbr.rel (%p256) target = $region48
        $region47: #{tpu_custom_call.1} parent=39 // pred_region
          %260 = dma.done [#allocation6], 4096
        $region48: #{tpu_custom_call.1} parent=39 // pred_fallthru
          _
        // Predicated region
        $region49: #{tpu_custom_call.1} parent=39 // pred_check
          %p261 = pneg %p87
        $region50: #{tpu_custom_call.1} parent=39 // pred_check_branch
          %263 = sbr.rel (%p261) target = $region52
        $region51: #{tpu_custom_call.1} parent=39 // pred_region
          %265 = dma.done [#allocation6], 32
        $region52: #{tpu_custom_call.1} parent=39 // pred_fallthru
          _
        // Predicated region
        $region53: #{tpu_custom_call.1} parent=39 // pred_check
          %p266 = pneg %p108
        $region54: #{tpu_custom_call.1} parent=39 // pred_check_branch
          %268 = sbr.rel (%p266) target = $region56
        $region55: #{tpu_custom_call.1} parent=39 // pred_region
          %270 = dma.done [#allocation9], 4096
        $region56: #{tpu_custom_call.1} parent=39 // pred_fallthru
          _
        %s271 = sand.u32 %s32, 1
        %s272 = scalar_lea.sflag [#allocation3], %s271
        %s273 = sand.u32 %s32, 1
        %s274 = smul.addr %s273, 64
        %s275 = scalar_lea.vmem [#allocation2], %s274
        %p276 = pneg %p45
        %p277 = pneg %p42
        %p278 = pneg %p66
        %p279 = pneg %p63
        %p280 = pneg %p87
        %p281 = pneg %p84
        %p282 = pneg %p108
        %p283 = pneg %p105
        %p284 = pneg %p129
        %p285 = pneg %p126
        %p286 = pneg %p155
        %p287 = pneg %p152
        %s288 = sand.u32 %s142, 1
        %s289 = scalar_lea.sflag [#allocation4], %s288
        %s290 = sand.u32 %s142, 1
        %s291 = smul.addr %s290, 64
        %s292 = scalar_lea.vmem [#allocation10], %s291
        %s293 = smul.u32 8, %s24
        %s294 = smul.u32 8, %s24
        %v295 = vld [vmem:[%s250] sm:$0xff]
        %v296 = vld [vmem:[%s250 + $0x8] sm:$0xff]
        %v297 = vld [vmem:[%s250 + $0x10] sm:$0xff]
        %v298 = vld [vmem:[%s250 + $0x18] sm:$0xff]
        %v299 = vld [vmem:[%s250 + $0x20] sm:$0xff]
        %v300 = vld [vmem:[%s250 + $0x28] sm:$0xff]
        %v301 = vld [vmem:[%s250 + $0x30] sm:$0xff]
        %v302 = vld [vmem:[%s250 + $0x38] sm:$0xff]
        %v303 = vld [vmem:[#allocation5] sm:$0xff]
        %v304 = vld [vmem:[#allocation5 + $0x8] sm:$0xff]
        %v305 = vld [vmem:[#allocation5 + $0x10] sm:$0xff]
        %v306 = vld [vmem:[#allocation5 + $0x18] sm:$0xff]
        %v307 = vld [vmem:[#allocation5 + $0x20] sm:$0xff]
        %v308 = vld [vmem:[#allocation5 + $0x28] sm:$0xff]
        %v309 = vld [vmem:[#allocation5 + $0x30] sm:$0xff]
        %v310 = vld [vmem:[#allocation5 + $0x38] sm:$0xff]
        %v311 = vld [vmem:[#allocation5 + $0x40] sm:$0xff]
        %v312 = vld [vmem:[#allocation5 + $0x48] sm:$0xff]
        %v313 = vld [vmem:[#allocation5 + $0x50] sm:$0xff]
        %v314 = vld [vmem:[#allocation5 + $0x58] sm:$0xff]
        %v315 = vld [vmem:[#allocation5 + $0x60] sm:$0xff]
        %v316 = vld [vmem:[#allocation5 + $0x68] sm:$0xff]
        %v317 = vld [vmem:[#allocation5 + $0x70] sm:$0xff]
        %v318 = vld [vmem:[#allocation5 + $0x78] sm:$0xff]
        %v319 = vld [vmem:[#allocation5 + $0x80] sm:$0xff]
        %v320 = vld [vmem:[#allocation5 + $0x88] sm:$0xff]
        %v321 = vld [vmem:[#allocation5 + $0x90] sm:$0xff]
        %v322 = vld [vmem:[#allocation5 + $0x98] sm:$0xff]
        %v323 = vld [vmem:[#allocation5 + $0xa0] sm:$0xff]
        %v324 = vld [vmem:[#allocation5 + $0xa8] sm:$0xff]
        %v325 = vld [vmem:[#allocation5 + $0xb0] sm:$0xff]
        %v326 = vld [vmem:[#allocation5 + $0xb8] sm:$0xff]
        %v327 = vld [vmem:[#allocation5 + $0xc0] sm:$0xff]
        %v328 = vld [vmem:[#allocation5 + $0xc8] sm:$0xff]
        %v329 = vld [vmem:[#allocation5 + $0xd0] sm:$0xff]
        %v330 = vld [vmem:[#allocation5 + $0xd8] sm:$0xff]
        %v331 = vld [vmem:[#allocation5 + $0xe0] sm:$0xff]
        %v332 = vld [vmem:[#allocation5 + $0xe8] sm:$0xff]
        %v333 = vld [vmem:[#allocation5 + $0xf0] sm:$0xff]
        %v334 = vld [vmem:[#allocation5 + $0xf8] sm:$0xff]
        %v335 = vld [vmem:[#allocation7] sm:$0x3]
        %v337 = vperm.slane %v335, 0
        %v338 = vperm.slane %v335, 1
        %341 = vmatpush.msra.mxu0 %v333
        %342 = vmatpush.msra.mxu0 %v331
        %343 = vmatpush.msra.mxu0 %v329
        %344 = vmatpush.msra.mxu0 %v327
        %345 = vmatpush.msra.mxu0 %v325
        %346 = vmatpush.msra.mxu0 %v323
        %347 = vmatpush.msra.mxu0 %v321
        %348 = vmatpush.msra.mxu0 %v319
        %349 = vmatpush.msra.mxu0 %v317
        %350 = vmatpush.msra.mxu0 %v315
        %351 = vmatpush.msra.mxu0 %v313
        %352 = vmatpush.msra.mxu0 %v311
        %353 = vmatpush.msra.mxu0 %v309
        %354 = vmatpush.msra.mxu0 %v307
        %355 = vmatpush.msra.mxu0 %v305
        %356 = vmatpush.msra.mxu0 %v303
        %357 = vmatmul.f32.gmra.mxu0 %v295
        %v358 = vpop.f32.mrf.mxu0
        %v359 = vadd.f32 %v337, %v358
        %360 = vmatmul.f32.gmra.mxu0 %v296
        %v361 = vpop.f32.mrf.mxu0
        %v362 = vadd.f32 %v337, %v361
        %363 = vmatmul.f32.gmra.mxu0 %v297
        %v364 = vpop.f32.mrf.mxu0
        %v365 = vadd.f32 %v337, %v364
        %366 = vmatmul.f32.gmra.mxu0 %v298
        %v367 = vpop.f32.mrf.mxu0
        %v368 = vadd.f32 %v337, %v367
        %369 = vmatmul.f32.gmra.mxu0 %v299
        %v370 = vpop.f32.mrf.mxu0
        %v371 = vadd.f32 %v337, %v370
        %372 = vmatmul.f32.gmra.mxu0 %v300
        %v373 = vpop.f32.mrf.mxu0
        %v374 = vadd.f32 %v337, %v373
        %375 = vmatmul.f32.gmra.mxu0 %v301
        %v376 = vpop.f32.mrf.mxu0
        %v377 = vadd.f32 %v337, %v376
        %378 = vmatmul.f32.gmra.mxu0 %v302
        %v379 = vpop.f32.mrf.mxu0
        %v380 = vadd.f32 %v337, %v379
        %381 = vdwg.mxu0
        %382 = vmatpush.msra.mxu0 %v334
        %383 = vmatpush.msra.mxu0 %v332
        %384 = vmatpush.msra.mxu0 %v330
        %385 = vmatpush.msra.mxu0 %v328
        %386 = vmatpush.msra.mxu0 %v326
        %387 = vmatpush.msra.mxu0 %v324
        %388 = vmatpush.msra.mxu0 %v322
        %389 = vmatpush.msra.mxu0 %v320
        %390 = vmatpush.msra.mxu0 %v318
        %391 = vmatpush.msra.mxu0 %v316
        %392 = vmatpush.msra.mxu0 %v314
        %393 = vmatpush.msra.mxu0 %v312
        %394 = vmatpush.msra.mxu0 %v310
        %395 = vmatpush.msra.mxu0 %v308
        %396 = vmatpush.msra.mxu0 %v306
        %397 = vmatpush.msra.mxu0 %v304
        %398 = vmatmul.f32.gmra.mxu0 %v295
        %v399 = vpop.f32.mrf.mxu0
        %v400 = vadd.f32 %v338, %v399
        %401 = vmatmul.f32.gmra.mxu0 %v296
        %v402 = vpop.f32.mrf.mxu0
        %v403 = vadd.f32 %v338, %v402
        %404 = vmatmul.f32.gmra.mxu0 %v297
        %v405 = vpop.f32.mrf.mxu0
        %v406 = vadd.f32 %v338, %v405
        %407 = vmatmul.f32.gmra.mxu0 %v298
        %v408 = vpop.f32.mrf.mxu0
        %v409 = vadd.f32 %v338, %v408
        %410 = vmatmul.f32.gmra.mxu0 %v299
        %v411 = vpop.f32.mrf.mxu0
        %v412 = vadd.f32 %v338, %v411
        %413 = vmatmul.f32.gmra.mxu0 %v300
        %v414 = vpop.f32.mrf.mxu0
        %v415 = vadd.f32 %v338, %v414
        %416 = vmatmul.f32.gmra.mxu0 %v301
        %v417 = vpop.f32.mrf.mxu0
        %v418 = vadd.f32 %v338, %v417
        %419 = vmatmul.f32.gmra.mxu0 %v302
        %v420 = vpop.f32.mrf.mxu0
        %v421 = vadd.f32 %v338, %v420
        %422 = vdwg.mxu0
        %vm423 = vcmp.ge.f32.partialorder %v359, 0.0
        %vm424 = vcmp.ge.f32.partialorder %v400, 0.0
        %vm425 = vcmp.ge.f32.partialorder %v362, 0.0
        %vm426 = vcmp.ge.f32.partialorder %v403, 0.0
        %vm427 = vcmp.ge.f32.partialorder %v365, 0.0
        %vm428 = vcmp.ge.f32.partialorder %v406, 0.0
        %vm429 = vcmp.ge.f32.partialorder %v368, 0.0
        %vm430 = vcmp.ge.f32.partialorder %v409, 0.0
        %vm431 = vcmp.ge.f32.partialorder %v371, 0.0
        %vm432 = vcmp.ge.f32.partialorder %v412, 0.0
        %vm433 = vcmp.ge.f32.partialorder %v374, 0.0
        %vm434 = vcmp.ge.f32.partialorder %v415, 0.0
        %vm435 = vcmp.ge.f32.partialorder %v377, 0.0
        %vm436 = vcmp.ge.f32.partialorder %v418, 0.0
        %vm437 = vcmp.ge.f32.partialorder %v380, 0.0
        %vm438 = vcmp.ge.f32.partialorder %v421, 0.0
        %v439 = vmul.f32 %v359, 0.01
        %v440 = vmul.f32 %v400, 0.01
        %v441 = vmul.f32 %v362, 0.01
        %v442 = vmul.f32 %v403, 0.01
        %v443 = vmul.f32 %v365, 0.01
        %v444 = vmul.f32 %v406, 0.01
        %v445 = vmul.f32 %v368, 0.01
        %v446 = vmul.f32 %v409, 0.01
        %v447 = vmul.f32 %v371, 0.01
        %v448 = vmul.f32 %v412, 0.01
        %v449 = vmul.f32 %v374, 0.01
        %v450 = vmul.f32 %v415, 0.01
        %v451 = vmul.f32 %v377, 0.01
        %v452 = vmul.f32 %v418, 0.01
        %v453 = vmul.f32 %v380, 0.01
        %v454 = vmul.f32 %v421, 0.01
        %v455 = vsel %vm423, %v359, %v439
        %v456 = vsel %vm424, %v400, %v440
        %v457 = vsel %vm425, %v362, %v441
        %v458 = vsel %vm426, %v403, %v442
        %v459 = vsel %vm427, %v365, %v443
        %v460 = vsel %vm428, %v406, %v444
        %v461 = vsel %vm429, %v368, %v445
        %v462 = vsel %vm430, %v409, %v446
        %v463 = vsel %vm431, %v371, %v447
        %v464 = vsel %vm432, %v412, %v448
        %v465 = vsel %vm433, %v374, %v449
        %v466 = vsel %vm434, %v415, %v450
        %v467 = vsel %vm435, %v377, %v451
        %v468 = vsel %vm436, %v418, %v452
        %v469 = vsel %vm437, %v380, %v453
        %v470 = vsel %vm438, %v421, %v454
        %v471 = vld [vmem:[#allocation8] sm:$0xff]
        %v472 = vld [vmem:[#allocation8 + $0x8] sm:$0xff]
        %v473 = vld [vmem:[#allocation8 + $0x10] sm:$0xff]
        %v474 = vld [vmem:[#allocation8 + $0x18] sm:$0xff]
        %v475 = vld [vmem:[#allocation8 + $0x20] sm:$0xff]
        %v476 = vld [vmem:[#allocation8 + $0x28] sm:$0xff]
        %v477 = vld [vmem:[#allocation8 + $0x30] sm:$0xff]
        %v478 = vld [vmem:[#allocation8 + $0x38] sm:$0xff]
        %v479 = vld [vmem:[#allocation8 + $0x40] sm:$0xff]
        %v480 = vld [vmem:[#allocation8 + $0x48] sm:$0xff]
        %v481 = vld [vmem:[#allocation8 + $0x50] sm:$0xff]
        %v482 = vld [vmem:[#allocation8 + $0x58] sm:$0xff]
        %v483 = vld [vmem:[#allocation8 + $0x60] sm:$0xff]
        %v484 = vld [vmem:[#allocation8 + $0x68] sm:$0xff]
        %v485 = vld [vmem:[#allocation8 + $0x70] sm:$0xff]
        %v486 = vld [vmem:[#allocation8 + $0x78] sm:$0xff]
        %v487 = vld [vmem:[#allocation8 + $0x80] sm:$0xff]
        %v488 = vld [vmem:[#allocation8 + $0x88] sm:$0xff]
        %v489 = vld [vmem:[#allocation8 + $0x90] sm:$0xff]
        %v490 = vld [vmem:[#allocation8 + $0x98] sm:$0xff]
        %v491 = vld [vmem:[#allocation8 + $0xa0] sm:$0xff]
        %v492 = vld [vmem:[#allocation8 + $0xa8] sm:$0xff]
        %v493 = vld [vmem:[#allocation8 + $0xb0] sm:$0xff]
        %v494 = vld [vmem:[#allocation8 + $0xb8] sm:$0xff]
        %v495 = vld [vmem:[#allocation8 + $0xc0] sm:$0xff]
        %v496 = vld [vmem:[#allocation8 + $0xc8] sm:$0xff]
        %v497 = vld [vmem:[#allocation8 + $0xd0] sm:$0xff]
        %v498 = vld [vmem:[#allocation8 + $0xd8] sm:$0xff]
        %v499 = vld [vmem:[#allocation8 + $0xe0] sm:$0xff]
        %v500 = vld [vmem:[#allocation8 + $0xe8] sm:$0xff]
        %v501 = vld [vmem:[#allocation8 + $0xf0] sm:$0xff]
        %v502 = vld [vmem:[#allocation8 + $0xf8] sm:$0xff]
        %v503 = vld [vmem:[%s4] sm:$0x1]
        %v505 = vperm.slane %v503, 0
        %507 = vmatpush.msra.mxu0 %v486
        %508 = vmatpush.msra.mxu0 %v485
        %509 = vmatpush.msra.mxu0 %v484
        %510 = vmatpush.msra.mxu0 %v483
        %511 = vmatpush.msra.mxu0 %v482
        %512 = vmatpush.msra.mxu0 %v481
        %513 = vmatpush.msra.mxu0 %v480
        %514 = vmatpush.msra.mxu0 %v479
        %515 = vmatpush.msra.mxu0 %v478
        %516 = vmatpush.msra.mxu0 %v477
        %517 = vmatpush.msra.mxu0 %v476
        %518 = vmatpush.msra.mxu0 %v475
        %519 = vmatpush.msra.mxu0 %v474
        %520 = vmatpush.msra.mxu0 %v473
        %521 = vmatpush.msra.mxu0 %v472
        %522 = vmatpush.msra.mxu0 %v471
        %523 = vmatmul.f32.gmra.mxu0 %v455
        %v524 = vpop.f32.mrf.mxu0
        %v525 = vadd.f32 %v505, %v524
        %526 = vmatmul.f32.gmra.mxu0 %v457
        %v527 = vpop.f32.mrf.mxu0
        %v528 = vadd.f32 %v505, %v527
        %529 = vmatmul.f32.gmra.mxu0 %v459
        %v530 = vpop.f32.mrf.mxu0
        %v531 = vadd.f32 %v505, %v530
        %532 = vmatmul.f32.gmra.mxu0 %v461
        %v533 = vpop.f32.mrf.mxu0
        %v534 = vadd.f32 %v505, %v533
        %535 = vmatmul.f32.gmra.mxu0 %v463
        %v536 = vpop.f32.mrf.mxu0
        %v537 = vadd.f32 %v505, %v536
        %538 = vmatmul.f32.gmra.mxu0 %v465
        %v539 = vpop.f32.mrf.mxu0
        %v540 = vadd.f32 %v505, %v539
        %541 = vmatmul.f32.gmra.mxu0 %v467
        %v542 = vpop.f32.mrf.mxu0
        %v543 = vadd.f32 %v505, %v542
        %544 = vmatmul.f32.gmra.mxu0 %v469
        %v545 = vpop.f32.mrf.mxu0
        %v546 = vadd.f32 %v505, %v545
        %547 = vdwg.mxu0
        %548 = vmatpush.msra.mxu0 %v502
        %549 = vmatpush.msra.mxu0 %v501
        %550 = vmatpush.msra.mxu0 %v500
        %551 = vmatpush.msra.mxu0 %v499
        %552 = vmatpush.msra.mxu0 %v498
        %553 = vmatpush.msra.mxu0 %v497
        %554 = vmatpush.msra.mxu0 %v496
        %555 = vmatpush.msra.mxu0 %v495
        %556 = vmatpush.msra.mxu0 %v494
        %557 = vmatpush.msra.mxu0 %v493
        %558 = vmatpush.msra.mxu0 %v492
        %559 = vmatpush.msra.mxu0 %v491
        %560 = vmatpush.msra.mxu0 %v490
        %561 = vmatpush.msra.mxu0 %v489
        %562 = vmatpush.msra.mxu0 %v488
        %563 = vmatpush.msra.mxu0 %v487
        %564 = vmatmul.f32.gmra.mxu0 %v456
        %v565 = vpop.f32.mrf.mxu0
        %v566 = vadd.f32 %v525, %v565
        %567 = vmatmul.f32.gmra.mxu0 %v458
        %v568 = vpop.f32.mrf.mxu0
        %v569 = vadd.f32 %v528, %v568
        %570 = vmatmul.f32.gmra.mxu0 %v460
        %v571 = vpop.f32.mrf.mxu0
        %v572 = vadd.f32 %v531, %v571
        %573 = vmatmul.f32.gmra.mxu0 %v462
        %v574 = vpop.f32.mrf.mxu0
        %v575 = vadd.f32 %v534, %v574
        %576 = vmatmul.f32.gmra.mxu0 %v464
        %v577 = vpop.f32.mrf.mxu0
        %v578 = vadd.f32 %v537, %v577
        %579 = vmatmul.f32.gmra.mxu0 %v466
        %v580 = vpop.f32.mrf.mxu0
        %v581 = vadd.f32 %v540, %v580
        %582 = vmatmul.f32.gmra.mxu0 %v468
        %v583 = vpop.f32.mrf.mxu0
        %v584 = vadd.f32 %v543, %v583
        %585 = vmatmul.f32.gmra.mxu0 %v470
        %v586 = vpop.f32.mrf.mxu0
        %v587 = vadd.f32 %v546, %v586
        %588 = vdwg.mxu0
        %vm589 = vcmp.ge.f32.partialorder %v566, 0.0
        %vm590 = vcmp.ge.f32.partialorder %v569, 0.0
        %vm591 = vcmp.ge.f32.partialorder %v572, 0.0
        %vm592 = vcmp.ge.f32.partialorder %v575, 0.0
        %vm593 = vcmp.ge.f32.partialorder %v578, 0.0
        %vm594 = vcmp.ge.f32.partialorder %v581, 0.0
        %vm595 = vcmp.ge.f32.partialorder %v584, 0.0
        %vm596 = vcmp.ge.f32.partialorder %v587, 0.0
        %v597 = vmul.f32 %v566, 0.01
        %v598 = vmul.f32 %v569, 0.01
        %v599 = vmul.f32 %v572, 0.01
        %v600 = vmul.f32 %v575, 0.01
        %v601 = vmul.f32 %v578, 0.01
        %v602 = vmul.f32 %v581, 0.01
        %v603 = vmul.f32 %v584, 0.01
        %v604 = vmul.f32 %v587, 0.01
        %v605 = vsel %vm589, %v566, %v597
        %v606 = vsel %vm590, %v569, %v598
        %v607 = vsel %vm591, %v572, %v599
        %v608 = vsel %vm592, %v575, %v600
        %v609 = vsel %vm593, %v578, %v601
        %v610 = vsel %vm594, %v581, %v602
        %v611 = vsel %vm595, %v584, %v603
        %v612 = vsel %vm596, %v587, %v604
        %613 = vst [vmem:[%s292] sm:$0xff] %v605
        %614 = vst [vmem:[%s292 + $0x8] sm:$0xff] %v606
        %615 = vst [vmem:[%s292 + $0x10] sm:$0xff] %v607
        %616 = vst [vmem:[%s292 + $0x18] sm:$0xff] %v608
        %617 = vst [vmem:[%s292 + $0x20] sm:$0xff] %v609
        %618 = vst [vmem:[%s292 + $0x28] sm:$0xff] %v610
        %619 = vst [vmem:[%s292 + $0x30] sm:$0xff] %v611
        %620 = vst [vmem:[%s292 + $0x38] sm:$0xff] %v612
        %s621 = sand.u32 %s142, 1
        %s622 = scalar_lea.sflag [#allocation4], %s621
        %s623 = sand.u32 %s142, 1
        %s624 = smul.addr %s623, 64
        %s625 = scalar_lea.vmem [#allocation10], %s624
        // Predicated region
        $region57: #{tpu_custom_call.1} parent=39 // pred_check
          %p626 = pneg %p152
        $region58: #{tpu_custom_call.1} parent=39 // pred_check_branch
          %628 = sbr.rel (%p626) target = $region60
        $region59: #{tpu_custom_call.1} parent=39 // pred_region
          %s629 = smul.u32 8, %s24
          %631 = vsyncadd %s622, 0
          %s632 = smul.addr %s629, 8
          %s633 = scalar_lea.hbm %s5, %s632
          %s634 = sshll.u32 %s625, 4
          %s635 = int_to_ptr.vmem [resolvable:$true] %s634
          %s636 = sshll.u32 %s633, 4
          %s637 = int_to_ptr.hbm [resolvable:$true] %s636
          %642 = dma.vmem_to_hbm [thread:$0]  %s635, 1024, %s637, %s622, 128, 128, 8
        $region60: #{tpu_custom_call.1} parent=39 // pred_fallthru
          _
      $region40: #{tpu_custom_call.1} parent=5 // pred_fallthru
        _
      %p643 = scmp.le.s32.totalorder 2, %s19
      // Predicated region
      $region61: #{tpu_custom_call.1} parent=5 // pred_check
        %p644 = pneg %p643
      $region62: #{tpu_custom_call.1} parent=5 // pred_check_branch
        %646 = sbr.rel (%p644) target = $region64
      $region63: #{tpu_custom_call.1} parent=5 // pred_region
        %s647 = ssub.s32 %s19, 2
        // Predicated region
        $region65: #{tpu_custom_call.1} parent=63 // pred_check
          %p648 = pneg %p158
        $region66: #{tpu_custom_call.1} parent=63 // pred_check_branch
          %650 = sbr.rel (%p648) target = $region68
        $region67: #{tpu_custom_call.1} parent=63 // pred_region
          %s651 = sand.u32 %s143, 1
          %s652 = scalar_lea.sflag [#allocation4], %s651
          %s653 = sand.u32 %s143, 1
          %s654 = smul.addr %s653, 64
          %s655 = scalar_lea.vmem [#allocation10], %s654
          %657 = dma.done %s652, 1024
        $region68: #{tpu_custom_call.1} parent=63 // pred_fallthru
          _
      $region64: #{tpu_custom_call.1} parent=5 // pred_fallthru
        _
    $region6: #{tpu_custom_call.1} parent=1 // loop_footer
      %s23 = sadd.s32 1, %s19
    $region7: #{tpu_custom_call.1} parent=1 // loop_footer_branch
      %18 = sbr.rel target = $region3
    $region8: #{tpu_custom_call.1} parent=1 // loop_exit
      _
    %658 = vsyncpa [#allocation3], 1
    %s659 = scalar_lea.sflag [#allocation3], 1
    %660 = vsyncpa %s659, 1
    %661 = vsyncpa [#allocation6], 1
    %662 = vsyncpa [#allocation9], 1
    %663 = vsyncpa [#allocation4], 1
    %s664 = scalar_lea.sflag [#allocation4], 1
    %665 = vsyncpa %s664, 1

</llo_original>
